<compile_context>
chip_gen: v6e
topology: v6e:2x2x1
jax: 0.10.0
libtpu: 0.0.40
codegen_flags: <defaults>
</compile_context>

<pallas_src>
import jax
import jax.numpy as jnp
import numpy as np
from jax.experimental import pallas as pl
from jax.experimental.pallas import tpu as pltpu

CIN, COUT, K, STRIDE, PAD = 2, 4, 3, 2, 0


def _convt_matmul_kernel(w_ref, t_ref, o_ref):
    # w_ref: (16, 16) f32 -- rows = (ph, pw, cout); cols = (cin, sh, sw) taps, bias col, zero pad
    # t_ref: (16, L)  f32 -- rows = (cin, sh, sw) shifted input views, ones row, zero pad
    # o_ref: (16, L)  f32 -- rows = (ph, pw, cout); lanes = flattened (n, a, b); L % 128 == 0
    o_ref[...] = jnp.dot(
        w_ref[...], t_ref[...],
        preferred_element_type=jnp.float32,
        precision=jax.lax.Precision.HIGHEST,
    )


def conv_transpose2d(x, weight, bias):
    """x: (N, CIN, H, W); weight: (CIN, COUT, K, K); bias: (COUT,).
    Matches torch.nn.ConvTranspose2d(2, 4, 3, stride=2, padding=0)."""
    n, cin, h, w = x.shape
    assert cin == CIN and weight.shape == (CIN, COUT, K, K)
    ho = (h - 1) * STRIDE - 2 * PAD + K
    wo = (w - 1) * STRIDE - 2 * PAD + K
    ha, wa = h + 1, w + 1                      # per-phase (padded) output extent

    # ---- T: 4 shifted views of the 1-zero-padded input, lane-dense -------------------
    xf = x.astype(jnp.float32)
    xpad = jnp.pad(xf, ((0, 0), (0, 0), (1, 1), (1, 1)))           # (n, cin, h+2, w+2)
    views = [xpad[:, :, 1 - sh:1 - sh + ha, 1 - sw:1 - sw + wa]    # (n, cin, ha, wa)
             for sh in (0, 1) for sw in (0, 1)]
    t = jnp.stack(views, axis=2)                                   # (n, cin, 4, ha, wa)
    t = jnp.transpose(t, (1, 2, 0, 3, 4)).reshape(CIN * 4, n * ha * wa)
    nvalid = n * ha * wa
    lanes = ((nvalid + 127) // 128) * 128
    t = jnp.pad(t, ((0, 0), (0, lanes - nvalid)))
    t_mat = jnp.concatenate([t, jnp.ones((1, lanes), jnp.float32)], axis=0)
    t_mat = jnp.pad(t_mat, ((0, 16 - t_mat.shape[0]), (0, 0)))     # (16, lanes)

    # ---- tap-weight matrix (pure trace-time layout; kh = ph + 2*sh, kw = pw + 2*sw) ---
    wf = weight.astype(jnp.float32)
    wpad = jnp.pad(wf, ((0, 0), (0, 0), (0, 1), (0, 1)))           # (cin,cout,4,4); kh/kw==3 -> 0
    w6 = wpad.reshape(CIN, COUT, 2, 2, 2, 2)                       # (c, d, sh, ph, sw, pw)
    wbig = jnp.transpose(w6, (3, 5, 1, 0, 2, 4)).reshape(4 * COUT, CIN * 4)
    bcol = jnp.tile(bias.astype(jnp.float32), 4).reshape(4 * COUT, 1)
    w_mat = jnp.concatenate([wbig, bcol], axis=1)                  # (16, 9)
    w_mat = jnp.pad(w_mat, ((0, 0), (0, 16 - w_mat.shape[1])))     # (16, 16)

    # ---- single-block Pallas call (no grid; everything resident in VMEM) --------------
    y = pl.pallas_call(
        _convt_matmul_kernel,
        out_shape=jax.ShapeDtypeStruct((4 * COUT, lanes), jnp.float32),
        in_specs=[pl.BlockSpec(memory_space=pltpu.MemorySpace.VMEM),
                  pl.BlockSpec(memory_space=pltpu.MemorySpace.VMEM)],
        out_specs=pl.BlockSpec(memory_space=pltpu.MemorySpace.VMEM),
    )(w_mat, t_mat)

    # ---- interleave the 4 phases back into (N, COUT, Ho, Wo) --------------------------
    y = y[:, :nvalid].reshape(2, 2, COUT, n, ha, wa)               # (ph, pw, d, n, a, b)
    y = jnp.transpose(y, (3, 2, 4, 0, 5, 1))                       # (n, d, a, ph, b, pw)
    out = y.reshape(n, COUT, 2 * ha, 2 * wa)[:, :, :ho, :wo]
    return out


if __name__ == "__main__":
    key = jax.random.PRNGKey(0)
    kx, kwt, kb = jax.random.split(key, 3)

    # Small input consistent with the module: N=2, Cin=2, 16x16 spatial.
    x = jax.random.normal(kx, (2, CIN, 16, 16), jnp.float32)
    bound = 1.0 / np.sqrt(CIN * K * K)          # deterministic synthetic init
    weight = jax.random.uniform(kwt, (CIN, COUT, K, K), jnp.float32, -bound, bound)
    bias = jax.random.uniform(kb, (COUT,), jnp.float32, -bound, bound)

    fn = jax.jit(conv_transpose2d)
    out = jax.block_until_ready(fn(x, weight, bias))

    # Reference: direct scatter formulation of ConvTranspose2d (pure NumPy).
    xn, wn, bn = np.asarray(x), np.asarray(weight), np.asarray(bias)
    N, _, H, W = xn.shape
    Ho = (H - 1) * STRIDE + K
    ref = np.zeros((N, COUT, Ho, Ho), np.float32)
    for kh in range(K):
        for kw_ in range(K):
            ref[:, :, kh:kh + STRIDE * H:STRIDE, kw_:kw_ + STRIDE * W:STRIDE] += np.einsum(
                "nchw,cd->ndhw", xn, wn[:, :, kh, kw_])
    ref += bn[None, :, None, None]

    np.testing.assert_allclose(np.asarray(out), ref, rtol=1e-4, atol=1e-4)
    print("KERNEL_OK")
</pallas_src>

<mosaic_0001>
module attributes {stable_mosaic.version = 11 : i64} {
  func.func @_convt_matmul_kernel(%arg0: memref<16x16xf32, #tpu.memory_space<vmem>>, %arg1: memref<16x640xf32, #tpu.memory_space<vmem>>, %arg2: memref<16x640xf32, #tpu.memory_space<vmem>>) attributes {dimension_semantics = [], scalar_prefetch = 0 : i64, scratch_operands = 0 : i64, tpu.core_type = #tpu.core_type<tc>} {
    %c0 = arith.constant 0 : index
    %c0_0 = arith.constant 0 : index
    %0 = vector.load %arg0[%c0, %c0_0] : memref<16x16xf32, #tpu.memory_space<vmem>>, vector<16x16xf32>
    %c0_1 = arith.constant 0 : index
    %c0_2 = arith.constant 0 : index
    %1 = vector.load %arg1[%c0_1, %c0_2] : memref<16x640xf32, #tpu.memory_space<vmem>>, vector<16x640xf32>
    %cst = arith.constant dense<0.000000e+00> : vector<16x640xf32>
    %2 = tpu.matmul %0, %1, %cst {dimension_numbers = #tpu.dot_dimension_numbers<[1], [0], [0], [1], [0, 0, 1, 1], [], []>, precision = #tpu.contract_precision<fp32>} : vector<16x16xf32>, vector<16x640xf32>, vector<16x640xf32> -> vector<16x640xf32>
    %c0_3 = arith.constant 0 : index
    %c0_4 = arith.constant 0 : index
    %3 = vector.load %arg2[%c0_3, %c0_4] : memref<16x640xf32, #tpu.memory_space<vmem>>, vector<16x640xf32>
    tpu.vector_store %arg2[%c0_3, %c0_4], %2 {strides = array<i32>} : memref<16x640xf32, #tpu.memory_space<vmem>>, vector<16x640xf32>,
    return
  }
}

</mosaic_0001>

<llo_original>
// kernel: tile.0
$region0: #{tile.0}
  %s0 = inlined_call_operand.vmem [shape: f32[4,4], index: 0, kind: input, shape index: {}]
  %s1 = inlined_call_operand.vmem [shape: f32[16,1], index: 1, kind: output, shape index: {}]
  $region1: #{tile.0} parent=0
    #allocation0 [shape = 'u8[4096]{0}', space=vmem, size = 0x1000, scoped, tag = 'scoped mem for input reshape']
    %s3 = sshll.u32 1, 4
    %s4 = ssub.s32 %s3, 1
    %v5 = vld [vmem:[%s0] sm:%s4]
    %6 = vst [vmem:[#allocation0] sm:%s4] %v5
    %v7 = vld [vmem:[#allocation0] sm:$0xf]
    %vm8 = vcmask 7168
    %9 = vst.msk [vmem:[%s1] ss:$4 sm:$0xf] %vm8, %v7
    %v10 = vld [vmem:[#allocation0] sm:$0xf]
    %11 = vrot.lane.b32.xlu0 %v10, 127
    %v12 = vpop.permute.xlu0 %11
    %vm13 = vcmask 7168
    %s14 = scalar_lea.vmem %s1, 1
    %15 = vst.msk [vmem:[%s14] ss:$4 sm:$0xf] %vm13, %v12
    %v16 = vld [vmem:[#allocation0] sm:$0xf]
    %17 = vrot.lane.b32.xlu0 %v16, 126
    %v18 = vpop.permute.xlu0 %17
    %vm19 = vcmask 7168
    %s20 = scalar_lea.vmem %s1, 2
    %21 = vst.msk [vmem:[%s20] ss:$4 sm:$0xf] %vm19, %v18
    %v22 = vld [vmem:[#allocation0] sm:$0xf]
    %23 = vrot.lane.b32.xlu0 %v22, 125
    %v24 = vpop.permute.xlu0 %23
    %vm25 = vcmask 7168
    %s26 = scalar_lea.vmem %s1, 3
    %27 = vst.msk [vmem:[%s26] ss:$4 sm:$0xf] %vm25, %v24

// kernel: tile.8
$region0: #{tile.8}
  #allocation2 [shape = 's32[1]{0}', space=sflag, size = 0x4, scoped, tag = 'scoped memory for tile.8']
  %s0 = inlined_call_operand.hbm [shape: f32[4], index: 0, kind: input, shape index: {}]
  %s1 = inlined_call_operand.vmem [shape: f32[4,4], index: 1, kind: output, shape index: {}]
  $region1: #{tile.8} parent=0
    #allocation0 [shape = 'u8[512]{0}', space=vmem, size = 0x400, scoped, tag = 'operand span for operand 0']
    #allocation1 [shape = 's32[1]{0}', space=sflag, size = 0x4, scoped, tag = 'scoped memory for tile.8']
    %2 = vsyncpa [#allocation1], 0
    // Predicated region
    $region2: #{tile.8} parent=1 // pred_check
      _
    $region3: #{tile.8} parent=1 // pred_check_branch
      %4 = sbr.rel (0) target = $region5
    $region4: #{tile.8} parent=1 // pred_region
      %s6 = ssub.s32 16, 16
      %7 = vsyncadd [#allocation1], %s6
      %s9 = sshll.u32 [#allocation0], 4
      %s10 = int_to_ptr.vmem [resolvable:$true] %s9
      %12 = dma.hbm_to_vmem [thread:$0]  %s0, 16, %s10, [#allocation1]
    $region5: #{tile.8} parent=1 // pred_fallthru
      _
    // Predicated region
    $region6: #{tile.8} parent=1 // pred_check
      _
    $region7: #{tile.8} parent=1 // pred_check_branch
      %14 = sbr.rel (0) target = $region9
    $region8: #{tile.8} parent=1 // pred_region
      %15 = dma.done [#allocation1], 16
    $region9: #{tile.8} parent=1 // pred_fallthru
      _
    %v16 = vld [vmem:[#allocation0] ss:$0 sm:$0xff]
    %17 = vst [vmem:[%s1] sm:$0xf] %v16
    %18 = vsyncpa [#allocation1], 1

// kernel: conv_transpose2d.1
$region0: #{conv_transpose2d.1}
  #allocation0 [shape = 'u32[]', space=smem, size = 0x4, offset = 0x4, fixed_abs, tag = 'smem constant byte address 0x4 - core index']
  #allocation1 [shape = 'u32[144,128]{1,0:T(1,128)}', space=vmem, size = 0x12000, scoped, tag = 'internal scratch']
  %s0 = inlined_call_operand.vmem [shape: f32[16,16], index: 0, kind: input, shape index: {}]
  %s1 = inlined_call_operand.vmem [shape: f32[16,640], index: 1, kind: input, shape index: {}]
  %s2 = inlined_call_operand.vmem [shape: f32[16,640], index: 2, kind: output, shape index: {}]
  %s3 = sld [smem:[#allocation0]]
  $region18: #{conv_transpose2d.1} parent=0
    _
  %s5 = ssub.s32 1, %s3
  %s6 = scalar_select 0, %s5, %s3
  // Predicated region
  $region2: #{conv_transpose2d.1} parent=0 // pred_check
    _
  $region3: #{conv_transpose2d.1} parent=0 // pred_check_branch
    %8 = sbr.rel (0) target = $region5
  $region4: #{conv_transpose2d.1} parent=0 // pred_region
    _
  $region5: #{conv_transpose2d.1} parent=0 // pred_fallthru
    _
  // Predicated region
  $region6: #{conv_transpose2d.1} parent=0 // pred_check
    _
  $region7: #{conv_transpose2d.1} parent=0 // pred_check_branch
    %10 = sbr.rel (0) target = $region9
  $region8: #{conv_transpose2d.1} parent=0 // pred_region
    _
  $region9: #{conv_transpose2d.1} parent=0 // pred_fallthru
    _
  %v11 = vld [vmem:[%s0] sm:$0xff]
  %v12 = vld [vmem:[%s0 + $0x8] sm:$0xff]
  %v13 = vld [vmem:[%s1] sm:$0xff]
  %v14 = vld [vmem:[%s1 + $0x8] sm:$0xff]
  %v15 = vld [vmem:[%s1 + $0x10] sm:$0xff]
  %v16 = vld [vmem:[%s1 + $0x18] sm:$0xff]
  %v17 = vld [vmem:[%s1 + $0x20] sm:$0xff]
  %v18 = vld [vmem:[%s1 + $0x28] sm:$0xff]
  %v19 = vld [vmem:[%s1 + $0x30] sm:$0xff]
  %v20 = vld [vmem:[%s1 + $0x38] sm:$0xff]
  %v21 = vld [vmem:[%s1 + $0x40] sm:$0xff]
  %v22 = vld [vmem:[%s1 + $0x48] sm:$0xff]
  %vm23 = vcmask 130048
  %v25 = vsel %vm23, %v11, 0
  %v28 = vsel %vm23, %v12, 0
  %30 = vmatprep.subr.mxu0 0.0
  %31 = vmatpush1.msra.mxu0 0.0
  %32 = vmatprep.subr.mxu0 0.0
  %33 = vmatpush1.msra.mxu0 0.0
  %34 = vmatprep.subr.mxu0 0.0
  %35 = vmatpush1.msra.mxu0 0.0
  %36 = vmatprep.subr.mxu0 0.0
  %37 = vmatpush1.msra.mxu0 0.0
  %38 = vmatprep.subr.mxu0 0.0
  %39 = vmatpush1.msra.mxu0 0.0
  %40 = vmatprep.subr.mxu0 0.0
  %41 = vmatpush1.msra.mxu0 0.0
  %42 = vmatprep.subr.mxu0 0.0
  %43 = vmatpush1.msra.mxu0 0.0
  %44 = vmatprep.subr.mxu0 0.0
  %45 = vmatpush1.msra.mxu0 0.0
  %46 = vmatprep.subr.mxu0 0.0
  %47 = vmatpush1.msra.mxu0 0.0
  %48 = vmatprep.subr.mxu0 0.0
  %49 = vmatpush1.msra.mxu0 0.0
  %50 = vmatprep.subr.mxu0 0.0
  %51 = vmatpush1.msra.mxu0 0.0
  %52 = vmatprep.subr.mxu0 0.0
  %53 = vmatpush1.msra.mxu0 0.0
  %54 = vmatprep.subr.mxu0 0.0
  %55 = vmatpush1.msra.mxu0 0.0
  %56 = vmatprep.subr.mxu0 0.0
  %57 = vmatpush1.msra.mxu0 0.0
  %v58 = vand.u32 %v19, 4294901760
  %59 = vmatprep.subr.mxu0 %v58
  %v60 = vand.u32 %v18, 4294901760
  %61 = vmatpush1.msra.mxu0 %v60
  %v62 = vand.u32 %v14, 4294901760
  %63 = vmatprep.subr.mxu0 %v62
  %v64 = vand.u32 %v13, 4294901760
  %65 = vmatpush1.msra.mxu0 %v64
  %66 = vmatprep.subr.mxu0 0.0
  %67 = vmatpush2.msra.mxu0 0.0
  %68 = vmatprep.subr.mxu0 0.0
  %69 = vmatpush2.msra.mxu0 0.0
  %70 = vmatprep.subr.mxu0 0.0
  %71 = vmatpush2.msra.mxu0 0.0
  %72 = vmatprep.subr.mxu0 0.0
  %73 = vmatpush2.msra.mxu0 0.0
  %74 = vmatprep.subr.mxu0 0.0
  %75 = vmatpush2.msra.mxu0 0.0
  %76 = vmatprep.subr.mxu0 0.0
  %77 = vmatpush2.msra.mxu0 0.0
  %78 = vmatprep.subr.mxu0 0.0
  %79 = vmatpush2.msra.mxu0 0.0
  %80 = vmatprep.subr.mxu0 0.0
  %81 = vmatpush2.msra.mxu0 0.0
  %82 = vmatprep.subr.mxu0 0.0
  %83 = vmatpush2.msra.mxu0 0.0
  %84 = vmatprep.subr.mxu0 0.0
  %85 = vmatpush2.msra.mxu0 0.0
  %86 = vmatprep.subr.mxu0 0.0
  %87 = vmatpush2.msra.mxu0 0.0
  %88 = vmatprep.subr.mxu0 0.0
  %89 = vmatpush2.msra.mxu0 0.0
  %90 = vmatprep.subr.mxu0 0.0
  %91 = vmatpush2.msra.mxu0 0.0
  %92 = vmatprep.subr.mxu0 0.0
  %93 = vmatpush2.msra.mxu0 0.0
  %94 = vmatprep.subr.mxu0 0.0
  %95 = vmatpush2.msra.mxu0 0.0
  %96 = vmatprep.subr.mxu0 0.0
  %97 = vmatpush2.msra.mxu0 0.0
  %98 = vmatprep.mubr.f32.mxu0 0.0
  %v99 = vand.u32 %v25, 4294901760
  %v100 = vsub.f32 %v25, %v99
  %v101 = vand.u32 %v100, 4294901760
  %v102 = vsub.f32 %v100, %v101
  %v103 = vand.u32 %v102, 4294901760
  %104 = vmatmul.mubr.f32.gmra.mxu0 %v103
  %v105 = vpop.f32.mrf.mxu0
  %v106 = vadd.f32 0.0, %v105
  %v107 = vpop.f32.mrf.mxu0
  %v108 = vadd.f32 0.0, %v107
  %109 = vmatprep.mubr.f32.mxu0 0.0
  %v110 = vand.u32 %v28, 4294901760
  %v111 = vsub.f32 %v28, %v110
  %v112 = vand.u32 %v111, 4294901760
  %v113 = vsub.f32 %v111, %v112
  %v114 = vand.u32 %v113, 4294901760
  %115 = vmatmul.mubr.f32.gmra.mxu0 %v114
  %v116 = vpop.f32.mrf.mxu0
  %v117 = vadd.f32 0.0, %v116
  %v118 = vpop.f32.mrf.mxu0
  %v119 = vadd.f32 0.0, %v118
  %120 = vdwg.mxu0
  %121 = vmatprep.subr.mxu0 0.0
  %122 = vmatpush1.msra.mxu0 0.0
  %123 = vmatprep.subr.mxu0 0.0
  %124 = vmatpush1.msra.mxu0 0.0
  %125 = vmatprep.subr.mxu0 0.0
  %126 = vmatpush1.msra.mxu0 0.0
  %127 = vmatprep.subr.mxu0 0.0
  %128 = vmatpush1.msra.mxu0 0.0
  %129 = vmatprep.subr.mxu0 0.0
  %130 = vmatpush1.msra.mxu0 0.0
  %131 = vmatprep.subr.mxu0 0.0
  %132 = vmatpush1.msra.mxu0 0.0
  %133 = vmatprep.subr.mxu0 0.0
  %134 = vmatpush1.msra.mxu0 0.0
  %135 = vmatprep.subr.mxu0 0.0
  %136 = vmatpush1.msra.mxu0 0.0
  %137 = vmatprep.subr.mxu0 0.0
  %138 = vmatpush1.msra.mxu0 0.0
  %139 = vmatprep.subr.mxu0 0.0
  %140 = vmatpush1.msra.mxu0 0.0
  %141 = vmatprep.subr.mxu0 0.0
  %142 = vmatpush1.msra.mxu0 0.0
  %143 = vmatprep.subr.mxu0 0.0
  %144 = vmatpush1.msra.mxu0 0.0
  %145 = vmatprep.subr.mxu0 0.0
  %146 = vmatpush1.msra.mxu0 0.0
  %147 = vmatprep.subr.mxu0 0.0
  %148 = vmatpush1.msra.mxu0 0.0
  %v149 = vand.u32 %v19, 4294901760
  %v150 = vsub.f32 %v19, %v149
  %v151 = vand.u32 %v150, 4294901760
  %v152 = vsub.f32 %v150, %v151
  %v153 = vand.u32 %v152, 4294901760
  %154 = vmatprep.subr.mxu0 %v153
  %v155 = vand.u32 %v18, 4294901760
  %v156 = vsub.f32 %v18, %v155
  %v157 = vand.u32 %v156, 4294901760
  %v158 = vsub.f32 %v156, %v157
  %v159 = vand.u32 %v158, 4294901760
  %160 = vmatpush1.msra.mxu0 %v159
  %v161 = vand.u32 %v14, 4294901760
  %v162 = vsub.f32 %v14, %v161
  %v163 = vand.u32 %v162, 4294901760
  %v164 = vsub.f32 %v162, %v163
  %v165 = vand.u32 %v164, 4294901760
  %166 = vmatprep.subr.mxu0 %v165
  %v167 = vand.u32 %v13, 4294901760
  %v168 = vsub.f32 %v13, %v167
  %v169 = vand.u32 %v168, 4294901760
  %v170 = vsub.f32 %v168, %v169
  %v171 = vand.u32 %v170, 4294901760
  %172 = vmatpush1.msra.mxu0 %v171
  %173 = vmatprep.subr.mxu0 0.0
  %174 = vmatpush2.msra.mxu0 0.0
  %175 = vmatprep.subr.mxu0 0.0
  %176 = vmatpush2.msra.mxu0 0.0
  %177 = vmatprep.subr.mxu0 0.0
  %178 = vmatpush2.msra.mxu0 0.0
  %179 = vmatprep.subr.mxu0 0.0
  %180 = vmatpush2.msra.mxu0 0.0
  %181 = vmatprep.subr.mxu0 0.0
  %182 = vmatpush2.msra.mxu0 0.0
  %183 = vmatprep.subr.mxu0 0.0
  %184 = vmatpush2.msra.mxu0 0.0
  %185 = vmatprep.subr.mxu0 0.0
  %186 = vmatpush2.msra.mxu0 0.0
  %187 = vmatprep.subr.mxu0 0.0
  %188 = vmatpush2.msra.mxu0 0.0
  %189 = vmatprep.subr.mxu0 0.0
  %190 = vmatpush2.msra.mxu0 0.0
  %191 = vmatprep.subr.mxu0 0.0
  %192 = vmatpush2.msra.mxu0 0.0
  %193 = vmatprep.subr.mxu0 0.0
  %194 = vmatpush2.msra.mxu0 0.0
  %195 = vmatprep.subr.mxu0 0.0
  %196 = vmatpush2.msra.mxu0 0.0
  %197 = vmatprep.subr.mxu0 0.0
  %198 = vmatpush2.msra.mxu0 0.0
  %199 = vmatprep.subr.mxu0 0.0
  %200 = vmatpush2.msra.mxu0 0.0
  %201 = vmatprep.subr.mxu0 0.0
  %202 = vmatpush2.msra.mxu0 0.0
  %203 = vmatprep.subr.mxu0 0.0
  %204 = vmatpush2.msra.mxu0 0.0
  %205 = vmatprep.mubr.f32.mxu0 0.0
  %v206 = vand.u32 %v25, 4294901760
  %207 = vmatmul.mubr.f32.gmra.mxu0 %v206
  %v208 = vpop.f32.mrf.mxu0
  %v209 = vadd.f32 %v106, %v208
  %v210 = vpop.f32.mrf.mxu0
  %v211 = vadd.f32 %v108, %v210
  %212 = vmatprep.mubr.f32.mxu0 0.0
  %v213 = vand.u32 %v28, 4294901760
  %214 = vmatmul.mubr.f32.gmra.mxu0 %v213
  %v215 = vpop.f32.mrf.mxu0
  %v216 = vadd.f32 %v117, %v215
  %v217 = vpop.f32.mrf.mxu0
  %v218 = vadd.f32 %v119, %v217
  %219 = vdwg.mxu0
  %220 = vmatprep.subr.mxu0 0.0
  %221 = vmatpush1.msra.mxu0 0.0
  %222 = vmatprep.subr.mxu0 0.0
  %223 = vmatpush1.msra.mxu0 0.0
  %224 = vmatprep.subr.mxu0 0.0
  %225 = vmatpush1.msra.mxu0 0.0
  %226 = vmatprep.subr.mxu0 0.0
  %227 = vmatpush1.msra.mxu0 0.0
  %228 = vmatprep.subr.mxu0 0.0
  %229 = vmatpush1.msra.mxu0 0.0
  %230 = vmatprep.subr.mxu0 0.0
  %231 = vmatpush1.msra.mxu0 0.0
  %232 = vmatprep.subr.mxu0 0.0
  %233 = vmatpush1.msra.mxu0 0.0
  %234 = vmatprep.subr.mxu0 0.0
  %235 = vmatpush1.msra.mxu0 0.0
  %236 = vmatprep.subr.mxu0 0.0
  %237 = vmatpush1.msra.mxu0 0.0
  %238 = vmatprep.subr.mxu0 0.0
  %239 = vmatpush1.msra.mxu0 0.0
  %240 = vmatprep.subr.mxu0 0.0
  %241 = vmatpush1.msra.mxu0 0.0
  %242 = vmatprep.subr.mxu0 0.0
  %243 = vmatpush1.msra.mxu0 0.0
  %244 = vmatprep.subr.mxu0 0.0
  %245 = vmatpush1.msra.mxu0 0.0
  %246 = vmatprep.subr.mxu0 0.0
  %247 = vmatpush1.msra.mxu0 0.0
  %v248 = vand.u32 %v19, 4294901760
  %v249 = vsub.f32 %v19, %v248
  %250 = vmatprep.subr.mxu0 %v249
  %v251 = vand.u32 %v18, 4294901760
  %v252 = vsub.f32 %v18, %v251
  %253 = vmatpush1.msra.mxu0 %v252
  %v254 = vand.u32 %v14, 4294901760
  %v255 = vsub.f32 %v14, %v254
  %256 = vmatprep.subr.mxu0 %v255
  %v257 = vand.u32 %v13, 4294901760
  %v258 = vsub.f32 %v13, %v257
  %259 = vmatpush1.msra.mxu0 %v258
  %260 = vmatprep.subr.mxu0 0.0
  %261 = vmatpush2.msra.mxu0 0.0
  %262 = vmatprep.subr.mxu0 0.0
  %263 = vmatpush2.msra.mxu0 0.0
  %264 = vmatprep.subr.mxu0 0.0
  %265 = vmatpush2.msra.mxu0 0.0
  %266 = vmatprep.subr.mxu0 0.0
  %267 = vmatpush2.msra.mxu0 0.0
  %268 = vmatprep.subr.mxu0 0.0
  %269 = vmatpush2.msra.mxu0 0.0
  %270 = vmatprep.subr.mxu0 0.0
  %271 = vmatpush2.msra.mxu0 0.0
  %272 = vmatprep.subr.mxu0 0.0
  %273 = vmatpush2.msra.mxu0 0.0
  %274 = vmatprep.subr.mxu0 0.0
  %275 = vmatpush2.msra.mxu0 0.0
  %276 = vmatprep.subr.mxu0 0.0
  %277 = vmatpush2.msra.mxu0 0.0
  %278 = vmatprep.subr.mxu0 0.0
  %279 = vmatpush2.msra.mxu0 0.0
  %280 = vmatprep.subr.mxu0 0.0
  %281 = vmatpush2.msra.mxu0 0.0
  %282 = vmatprep.subr.mxu0 0.0
  %283 = vmatpush2.msra.mxu0 0.0
  %284 = vmatprep.subr.mxu0 0.0
  %285 = vmatpush2.msra.mxu0 0.0
  %286 = vmatprep.subr.mxu0 0.0
  %287 = vmatpush2.msra.mxu0 0.0
  %288 = vmatprep.subr.mxu0 0.0
  %289 = vmatpush2.msra.mxu0 0.0
  %290 = vmatprep.subr.mxu0 0.0
  %291 = vmatpush2.msra.mxu0 0.0
  %292 = vmatprep.mubr.f32.mxu0 0.0
  %v293 = vand.u32 %v25, 4294901760
  %v294 = vsub.f32 %v25, %v293
  %295 = vmatmul.mubr.f32.gmra.mxu0 %v294
  %v296 = vpop.f32.mrf.mxu0
  %v297 = vadd.f32 %v209, %v296
  %v298 = vpop.f32.mrf.mxu0
  %v299 = vadd.f32 %v211, %v298
  %300 = vmatprep.mubr.f32.mxu0 0.0
  %v301 = vand.u32 %v28, 4294901760
  %v302 = vsub.f32 %v28, %v301
  %303 = vmatmul.mubr.f32.gmra.mxu0 %v302
  %v304 = vpop.f32.mrf.mxu0
  %v305 = vadd.f32 %v216, %v304
  %v306 = vpop.f32.mrf.mxu0
  %v307 = vadd.f32 %v218, %v306
  %308 = vdwg.mxu0
  %309 = vmatprep.subr.mxu0 0.0
  %310 = vmatpush1.msra.mxu0 0.0
  %311 = vmatprep.subr.mxu0 0.0
  %312 = vmatpush1.msra.mxu0 0.0
  %313 = vmatprep.subr.mxu0 0.0
  %314 = vmatpush1.msra.mxu0 0.0
  %315 = vmatprep.subr.mxu0 0.0
  %316 = vmatpush1.msra.mxu0 0.0
  %317 = vmatprep.subr.mxu0 0.0
  %318 = vmatpush1.msra.mxu0 0.0
  %319 = vmatprep.subr.mxu0 0.0
  %320 = vmatpush1.msra.mxu0 0.0
  %321 = vmatprep.subr.mxu0 0.0
  %322 = vmatpush1.msra.mxu0 0.0
  %323 = vmatprep.subr.mxu0 0.0
  %324 = vmatpush1.msra.mxu0 0.0
  %325 = vmatprep.subr.mxu0 0.0
  %326 = vmatpush1.msra.mxu0 0.0
  %327 = vmatprep.subr.mxu0 0.0
  %328 = vmatpush1.msra.mxu0 0.0
  %329 = vmatprep.subr.mxu0 0.0
  %330 = vmatpush1.msra.mxu0 0.0
  %331 = vmatprep.subr.mxu0 0.0
  %332 = vmatpush1.msra.mxu0 0.0
  %333 = vmatprep.subr.mxu0 0.0
  %334 = vmatpush1.msra.mxu0 0.0
  %335 = vmatprep.subr.mxu0 0.0
  %336 = vmatpush1.msra.mxu0 0.0
  %v337 = vand.u32 %v19, 4294901760
  %338 = vmatprep.subr.mxu0 %v337
  %v339 = vand.u32 %v18, 4294901760
  %340 = vmatpush1.msra.mxu0 %v339
  %v341 = vand.u32 %v14, 4294901760
  %342 = vmatprep.subr.mxu0 %v341
  %v343 = vand.u32 %v13, 4294901760
  %344 = vmatpush1.msra.mxu0 %v343
  %345 = vmatprep.subr.mxu0 0.0
  %346 = vmatpush2.msra.mxu0 0.0
  %347 = vmatprep.subr.mxu0 0.0
  %348 = vmatpush2.msra.mxu0 0.0
  %349 = vmatprep.subr.mxu0 0.0
  %350 = vmatpush2.msra.mxu0 0.0
  %351 = vmatprep.subr.mxu0 0.0
  %352 = vmatpush2.msra.mxu0 0.0
  %353 = vmatprep.subr.mxu0 0.0
  %354 = vmatpush2.msra.mxu0 0.0
  %355 = vmatprep.subr.mxu0 0.0
  %356 = vmatpush2.msra.mxu0 0.0
  %357 = vmatprep.subr.mxu0 0.0
  %358 = vmatpush2.msra.mxu0 0.0
  %359 = vmatprep.subr.mxu0 0.0
  %360 = vmatpush2.msra.mxu0 0.0
  %361 = vmatprep.subr.mxu0 0.0
  %362 = vmatpush2.msra.mxu0 0.0
  %363 = vmatprep.subr.mxu0 0.0
  %364 = vmatpush2.msra.mxu0 0.0
  %365 = vmatprep.subr.mxu0 0.0
  %366 = vmatpush2.msra.mxu0 0.0
  %367 = vmatprep.subr.mxu0 0.0
  %368 = vmatpush2.msra.mxu0 0.0
  %369 = vmatprep.subr.mxu0 0.0
  %370 = vmatpush2.msra.mxu0 0.0
  %371 = vmatprep.subr.mxu0 0.0
  %372 = vmatpush2.msra.mxu0 0.0
  %373 = vmatprep.subr.mxu0 0.0
  %374 = vmatpush2.msra.mxu0 0.0
  %375 = vmatprep.subr.mxu0 0.0
  %376 = vmatpush2.msra.mxu0 0.0
  %377 = vmatprep.mubr.f32.mxu0 0.0
  %v378 = vand.u32 %v25, 4294901760
  %v379 = vsub.f32 %v25, %v378
  %v380 = vand.u32 %v379, 4294901760
  %381 = vmatmul.mubr.f32.gmra.mxu0 %v380
  %v382 = vpop.f32.mrf.mxu0
  %v383 = vadd.f32 %v297, %v382
  %v384 = vpop.f32.mrf.mxu0
  %v385 = vadd.f32 %v299, %v384
  %386 = vmatprep.mubr.f32.mxu0 0.0
  %v387 = vand.u32 %v28, 4294901760
  %v388 = vsub.f32 %v28, %v387
  %v389 = vand.u32 %v388, 4294901760
  %390 = vmatmul.mubr.f32.gmra.mxu0 %v389
  %v391 = vpop.f32.mrf.mxu0
  %v392 = vadd.f32 %v305, %v391
  %v393 = vpop.f32.mrf.mxu0
  %v394 = vadd.f32 %v307, %v393
  %395 = vdwg.mxu0
  %396 = vmatprep.subr.mxu0 0.0
  %397 = vmatpush1.msra.mxu0 0.0
  %398 = vmatprep.subr.mxu0 0.0
  %399 = vmatpush1.msra.mxu0 0.0
  %400 = vmatprep.subr.mxu0 0.0
  %401 = vmatpush1.msra.mxu0 0.0
  %402 = vmatprep.subr.mxu0 0.0
  %403 = vmatpush1.msra.mxu0 0.0
  %404 = vmatprep.subr.mxu0 0.0
  %405 = vmatpush1.msra.mxu0 0.0
  %406 = vmatprep.subr.mxu0 0.0
  %407 = vmatpush1.msra.mxu0 0.0
  %408 = vmatprep.subr.mxu0 0.0
  %409 = vmatpush1.msra.mxu0 0.0
  %410 = vmatprep.subr.mxu0 0.0
  %411 = vmatpush1.msra.mxu0 0.0
  %412 = vmatprep.subr.mxu0 0.0
  %413 = vmatpush1.msra.mxu0 0.0
  %414 = vmatprep.subr.mxu0 0.0
  %415 = vmatpush1.msra.mxu0 0.0
  %416 = vmatprep.subr.mxu0 0.0
  %417 = vmatpush1.msra.mxu0 0.0
  %418 = vmatprep.subr.mxu0 0.0
  %419 = vmatpush1.msra.mxu0 0.0
  %420 = vmatprep.subr.mxu0 0.0
  %421 = vmatpush1.msra.mxu0 0.0
  %422 = vmatprep.subr.mxu0 0.0
  %423 = vmatpush1.msra.mxu0 0.0
  %v424 = vand.u32 %v19, 4294901760
  %v425 = vsub.f32 %v19, %v424
  %v426 = vand.u32 %v425, 4294901760
  %427 = vmatprep.subr.mxu0 %v426
  %v428 = vand.u32 %v18, 4294901760
  %v429 = vsub.f32 %v18, %v428
  %v430 = vand.u32 %v429, 4294901760
  %431 = vmatpush1.msra.mxu0 %v430
  %v432 = vand.u32 %v14, 4294901760
  %v433 = vsub.f32 %v14, %v432
  %v434 = vand.u32 %v433, 4294901760
  %435 = vmatprep.subr.mxu0 %v434
  %v436 = vand.u32 %v13, 4294901760
  %v437 = vsub.f32 %v13, %v436
  %v438 = vand.u32 %v437, 4294901760
  %439 = vmatpush1.msra.mxu0 %v438
  %440 = vmatprep.subr.mxu0 0.0
  %441 = vmatpush2.msra.mxu0 0.0
  %442 = vmatprep.subr.mxu0 0.0
  %443 = vmatpush2.msra.mxu0 0.0
  %444 = vmatprep.subr.mxu0 0.0
  %445 = vmatpush2.msra.mxu0 0.0
  %446 = vmatprep.subr.mxu0 0.0
  %447 = vmatpush2.msra.mxu0 0.0
  %448 = vmatprep.subr.mxu0 0.0
  %449 = vmatpush2.msra.mxu0 0.0
  %450 = vmatprep.subr.mxu0 0.0
  %451 = vmatpush2.msra.mxu0 0.0
  %452 = vmatprep.subr.mxu0 0.0
  %453 = vmatpush2.msra.mxu0 0.0
  %454 = vmatprep.subr.mxu0 0.0
  %455 = vmatpush2.msra.mxu0 0.0
  %456 = vmatprep.subr.mxu0 0.0
  %457 = vmatpush2.msra.mxu0 0.0
  %458 = vmatprep.subr.mxu0 0.0
  %459 = vmatpush2.msra.mxu0 0.0
  %460 = vmatprep.subr.mxu0 0.0
  %461 = vmatpush2.msra.mxu0 0.0
  %462 = vmatprep.subr.mxu0 0.0
  %463 = vmatpush2.msra.mxu0 0.0
  %464 = vmatprep.subr.mxu0 0.0
  %465 = vmatpush2.msra.mxu0 0.0
  %466 = vmatprep.subr.mxu0 0.0
  %467 = vmatpush2.msra.mxu0 0.0
  %468 = vmatprep.subr.mxu0 0.0
  %469 = vmatpush2.msra.mxu0 0.0
  %470 = vmatprep.subr.mxu0 0.0
  %471 = vmatpush2.msra.mxu0 0.0
  %472 = vmatprep.mubr.f32.mxu0 0.0
  %v473 = vand.u32 %v25, 4294901760
  %474 = vmatmul.mubr.f32.gmra.mxu0 %v473
  %v475 = vpop.f32.mrf.mxu0
  %v476 = vadd.f32 %v383, %v475
  %v477 = vpop.f32.mrf.mxu0
  %v478 = vadd.f32 %v385, %v477
  %479 = vmatprep.mubr.f32.mxu0 0.0
  %v480 = vand.u32 %v28, 4294901760
  %481 = vmatmul.mubr.f32.gmra.mxu0 %v480
  %v482 = vpop.f32.mrf.mxu0
  %v483 = vadd.f32 %v392, %v482
  %v484 = vpop.f32.mrf.mxu0
  %v485 = vadd.f32 %v394, %v484
  %486 = vdwg.mxu0
  %487 = vmatprep.subr.mxu0 0.0
  %488 = vmatpush1.msra.mxu0 0.0
  %489 = vmatprep.subr.mxu0 0.0
  %490 = vmatpush1.msra.mxu0 0.0
  %491 = vmatprep.subr.mxu0 0.0
  %492 = vmatpush1.msra.mxu0 0.0
  %493 = vmatprep.subr.mxu0 0.0
  %494 = vmatpush1.msra.mxu0 0.0
  %495 = vmatprep.subr.mxu0 0.0
  %496 = vmatpush1.msra.mxu0 0.0
  %497 = vmatprep.subr.mxu0 0.0
  %498 = vmatpush1.msra.mxu0 0.0
  %499 = vmatprep.subr.mxu0 0.0
  %500 = vmatpush1.msra.mxu0 0.0
  %501 = vmatprep.subr.mxu0 0.0
  %502 = vmatpush1.msra.mxu0 0.0
  %503 = vmatprep.subr.mxu0 0.0
  %504 = vmatpush1.msra.mxu0 0.0
  %505 = vmatprep.subr.mxu0 0.0
  %506 = vmatpush1.msra.mxu0 0.0
  %507 = vmatprep.subr.mxu0 0.0
  %508 = vmatpush1.msra.mxu0 0.0
  %509 = vmatprep.subr.mxu0 0.0
  %510 = vmatpush1.msra.mxu0 0.0
  %511 = vmatprep.subr.mxu0 0.0
  %512 = vmatpush1.msra.mxu0 0.0
  %513 = vmatprep.subr.mxu0 0.0
  %514 = vmatpush1.msra.mxu0 0.0
  %v515 = vand.u32 %v19, 4294901760
  %516 = vmatprep.subr.mxu0 %v515
  %v517 = vand.u32 %v18, 4294901760
  %518 = vmatpush1.msra.mxu0 %v517
  %v519 = vand.u32 %v14, 4294901760
  %520 = vmatprep.subr.mxu0 %v519
  %v521 = vand.u32 %v13, 4294901760
  %522 = vmatpush1.msra.mxu0 %v521
  %523 = vmatprep.subr.mxu0 0.0
  %524 = vmatpush2.msra.mxu0 0.0
  %525 = vmatprep.subr.mxu0 0.0
  %526 = vmatpush2.msra.mxu0 0.0
  %527 = vmatprep.subr.mxu0 0.0
  %528 = vmatpush2.msra.mxu0 0.0
  %529 = vmatprep.subr.mxu0 0.0
  %530 = vmatpush2.msra.mxu0 0.0
  %531 = vmatprep.subr.mxu0 0.0
  %532 = vmatpush2.msra.mxu0 0.0
  %533 = vmatprep.subr.mxu0 0.0
  %534 = vmatpush2.msra.mxu0 0.0
  %535 = vmatprep.subr.mxu0 0.0
  %536 = vmatpush2.msra.mxu0 0.0
  %537 = vmatprep.subr.mxu0 0.0
  %538 = vmatpush2.msra.mxu0 0.0
  %539 = vmatprep.subr.mxu0 0.0
  %540 = vmatpush2.msra.mxu0 0.0
  %541 = vmatprep.subr.mxu0 0.0
  %542 = vmatpush2.msra.mxu0 0.0
  %543 = vmatprep.subr.mxu0 0.0
  %544 = vmatpush2.msra.mxu0 0.0
  %545 = vmatprep.subr.mxu0 0.0
  %546 = vmatpush2.msra.mxu0 0.0
  %547 = vmatprep.subr.mxu0 0.0
  %548 = vmatpush2.msra.mxu0 0.0
  %549 = vmatprep.subr.mxu0 0.0
  %550 = vmatpush2.msra.mxu0 0.0
  %551 = vmatprep.subr.mxu0 0.0
  %552 = vmatpush2.msra.mxu0 0.0
  %553 = vmatprep.subr.mxu0 0.0
  %554 = vmatpush2.msra.mxu0 0.0
  %555 = vmatprep.mubr.f32.mxu0 0.0
  %v556 = vand.u32 %v25, 4294901760
  %557 = vmatmul.mubr.f32.gmra.mxu0 %v556
  %v558 = vpop.f32.mrf.mxu0
  %v559 = vadd.f32 %v476, %v558
  %v560 = vpop.f32.mrf.mxu0
  %v561 = vadd.f32 %v478, %v560
  %562 = vmatprep.mubr.f32.mxu0 0.0
  %v563 = vand.u32 %v28, 4294901760
  %564 = vmatmul.mubr.f32.gmra.mxu0 %v563
  %v565 = vpop.f32.mrf.mxu0
  %v566 = vadd.f32 %v483, %v565
  %v567 = vpop.f32.mrf.mxu0
  %v568 = vadd.f32 %v485, %v567
  %569 = vdwg.mxu0
  %570 = vmatprep.subr.mxu0 0.0
  %571 = vmatpush1.msra.mxu0 0.0
  %572 = vmatprep.subr.mxu0 0.0
  %573 = vmatpush1.msra.mxu0 0.0
  %574 = vmatprep.subr.mxu0 0.0
  %575 = vmatpush1.msra.mxu0 0.0
  %576 = vmatprep.subr.mxu0 0.0
  %577 = vmatpush1.msra.mxu0 0.0
  %578 = vmatprep.subr.mxu0 0.0
  %579 = vmatpush1.msra.mxu0 0.0
  %580 = vmatprep.subr.mxu0 0.0
  %581 = vmatpush1.msra.mxu0 0.0
  %582 = vmatprep.subr.mxu0 0.0
  %583 = vmatpush1.msra.mxu0 0.0
  %584 = vmatprep.subr.mxu0 0.0
  %585 = vmatpush1.msra.mxu0 0.0
  %586 = vmatprep.subr.mxu0 0.0
  %587 = vmatpush1.msra.mxu0 0.0
  %588 = vmatprep.subr.mxu0 0.0
  %589 = vmatpush1.msra.mxu0 0.0
  %590 = vmatprep.subr.mxu0 0.0
  %591 = vmatpush1.msra.mxu0 0.0
  %592 = vmatprep.subr.mxu0 0.0
  %593 = vmatpush1.msra.mxu0 0.0
  %594 = vmatprep.subr.mxu0 0.0
  %595 = vmatpush1.msra.mxu0 0.0
  %596 = vmatprep.subr.mxu0 0.0
  %597 = vmatpush1.msra.mxu0 0.0
  %v598 = vand.u32 %v21, 4294901760
  %599 = vmatprep.subr.mxu0 %v598
  %v600 = vand.u32 %v20, 4294901760
  %601 = vmatpush1.msra.mxu0 %v600
  %v602 = vand.u32 %v16, 4294901760
  %603 = vmatprep.subr.mxu0 %v602
  %v604 = vand.u32 %v15, 4294901760
  %605 = vmatpush1.msra.mxu0 %v604
  %606 = vmatprep.subr.mxu0 0.0
  %607 = vmatpush2.msra.mxu0 0.0
  %608 = vmatprep.subr.mxu0 0.0
  %609 = vmatpush2.msra.mxu0 0.0
  %610 = vmatprep.subr.mxu0 0.0
  %611 = vmatpush2.msra.mxu0 0.0
  %612 = vmatprep.subr.mxu0 0.0
  %613 = vmatpush2.msra.mxu0 0.0
  %614 = vmatprep.subr.mxu0 0.0
  %615 = vmatpush2.msra.mxu0 0.0
  %616 = vmatprep.subr.mxu0 0.0
  %617 = vmatpush2.msra.mxu0 0.0
  %618 = vmatprep.subr.mxu0 0.0
  %619 = vmatpush2.msra.mxu0 0.0
  %620 = vmatprep.subr.mxu0 0.0
  %621 = vmatpush2.msra.mxu0 0.0
  %622 = vmatprep.subr.mxu0 0.0
  %623 = vmatpush2.msra.mxu0 0.0
  %624 = vmatprep.subr.mxu0 0.0
  %625 = vmatpush2.msra.mxu0 0.0
  %626 = vmatprep.subr.mxu0 0.0
  %627 = vmatpush2.msra.mxu0 0.0
  %628 = vmatprep.subr.mxu0 0.0
  %629 = vmatpush2.msra.mxu0 0.0
  %630 = vmatprep.subr.mxu0 0.0
  %631 = vmatpush2.msra.mxu0 0.0
  %632 = vmatprep.subr.mxu0 0.0
  %633 = vmatpush2.msra.mxu0 0.0
  %634 = vmatprep.subr.mxu0 0.0
  %635 = vmatpush2.msra.mxu0 0.0
  %636 = vmatprep.subr.mxu0 0.0
  %637 = vmatpush2.msra.mxu0 0.0
  %638 = vmatprep.mubr.f32.mxu0 0.0
  %v639 = vand.u32 %v25, 4294901760
  %v640 = vsub.f32 %v25, %v639
  %v641 = vand.u32 %v640, 4294901760
  %v642 = vsub.f32 %v640, %v641
  %v643 = vand.u32 %v642, 4294901760
  %644 = vmatmul.mubr.f32.gmra.mxu0 %v643
  %v645 = vpop.f32.mrf.mxu0
  %v646 = vadd.f32 0.0, %v645
  %v647 = vpop.f32.mrf.mxu0
  %v648 = vadd.f32 0.0, %v647
  %649 = vmatprep.mubr.f32.mxu0 0.0
  %v650 = vand.u32 %v28, 4294901760
  %v651 = vsub.f32 %v28, %v650
  %v652 = vand.u32 %v651, 4294901760
  %v653 = vsub.f32 %v651, %v652
  %v654 = vand.u32 %v653, 4294901760
  %655 = vmatmul.mubr.f32.gmra.mxu0 %v654
  %v656 = vpop.f32.mrf.mxu0
  %v657 = vadd.f32 0.0, %v656
  %v658 = vpop.f32.mrf.mxu0
  %v659 = vadd.f32 0.0, %v658
  %660 = vdwg.mxu0
  %661 = vmatprep.subr.mxu0 0.0
  %662 = vmatpush1.msra.mxu0 0.0
  %663 = vmatprep.subr.mxu0 0.0
  %664 = vmatpush1.msra.mxu0 0.0
  %665 = vmatprep.subr.mxu0 0.0
  %666 = vmatpush1.msra.mxu0 0.0
  %667 = vmatprep.subr.mxu0 0.0
  %668 = vmatpush1.msra.mxu0 0.0
  %669 = vmatprep.subr.mxu0 0.0
  %670 = vmatpush1.msra.mxu0 0.0
  %671 = vmatprep.subr.mxu0 0.0
  %672 = vmatpush1.msra.mxu0 0.0
  %673 = vmatprep.subr.mxu0 0.0
  %674 = vmatpush1.msra.mxu0 0.0
  %675 = vmatprep.subr.mxu0 0.0
  %676 = vmatpush1.msra.mxu0 0.0
  %677 = vmatprep.subr.mxu0 0.0
  %678 = vmatpush1.msra.mxu0 0.0
  %679 = vmatprep.subr.mxu0 0.0
  %680 = vmatpush1.msra.mxu0 0.0
  %681 = vmatprep.subr.mxu0 0.0
  %682 = vmatpush1.msra.mxu0 0.0
  %683 = vmatprep.subr.mxu0 0.0
  %684 = vmatpush1.msra.mxu0 0.0
  %685 = vmatprep.subr.mxu0 0.0
  %686 = vmatpush1.msra.mxu0 0.0
  %687 = vmatprep.subr.mxu0 0.0
  %688 = vmatpush1.msra.mxu0 0.0
  %v689 = vand.u32 %v21, 4294901760
  %v690 = vsub.f32 %v21, %v689
  %v691 = vand.u32 %v690, 4294901760
  %v692 = vsub.f32 %v690, %v691
  %v693 = vand.u32 %v692, 4294901760
  %694 = vmatprep.subr.mxu0 %v693
  %v695 = vand.u32 %v20, 4294901760
  %v696 = vsub.f32 %v20, %v695
  %v697 = vand.u32 %v696, 4294901760
  %v698 = vsub.f32 %v696, %v697
  %v699 = vand.u32 %v698, 4294901760
  %700 = vmatpush1.msra.mxu0 %v699
  %v701 = vand.u32 %v16, 4294901760
  %v702 = vsub.f32 %v16, %v701
  %v703 = vand.u32 %v702, 4294901760
  %v704 = vsub.f32 %v702, %v703
  %v705 = vand.u32 %v704, 4294901760
  %706 = vmatprep.subr.mxu0 %v705
  %v707 = vand.u32 %v15, 4294901760
  %v708 = vsub.f32 %v15, %v707
  %v709 = vand.u32 %v708, 4294901760
  %v710 = vsub.f32 %v708, %v709
  %v711 = vand.u32 %v710, 4294901760
  %712 = vmatpush1.msra.mxu0 %v711
  %713 = vmatprep.subr.mxu0 0.0
  %714 = vmatpush2.msra.mxu0 0.0
  %715 = vmatprep.subr.mxu0 0.0
  %716 = vmatpush2.msra.mxu0 0.0
  %717 = vmatprep.subr.mxu0 0.0
  %718 = vmatpush2.msra.mxu0 0.0
  %719 = vmatprep.subr.mxu0 0.0
  %720 = vmatpush2.msra.mxu0 0.0
  %721 = vmatprep.subr.mxu0 0.0
  %722 = vmatpush2.msra.mxu0 0.0
  %723 = vmatprep.subr.mxu0 0.0
  %724 = vmatpush2.msra.mxu0 0.0
  %725 = vmatprep.subr.mxu0 0.0
  %726 = vmatpush2.msra.mxu0 0.0
  %727 = vmatprep.subr.mxu0 0.0
  %728 = vmatpush2.msra.mxu0 0.0
  %729 = vmatprep.subr.mxu0 0.0
  %730 = vmatpush2.msra.mxu0 0.0
  %731 = vmatprep.subr.mxu0 0.0
  %732 = vmatpush2.msra.mxu0 0.0
  %733 = vmatprep.subr.mxu0 0.0
  %734 = vmatpush2.msra.mxu0 0.0
  %735 = vmatprep.subr.mxu0 0.0
  %736 = vmatpush2.msra.mxu0 0.0
  %737 = vmatprep.subr.mxu0 0.0
  %738 = vmatpush2.msra.mxu0 0.0
  %739 = vmatprep.subr.mxu0 0.0
  %740 = vmatpush2.msra.mxu0 0.0
  %741 = vmatprep.subr.mxu0 0.0
  %742 = vmatpush2.msra.mxu0 0.0
  %743 = vmatprep.subr.mxu0 0.0
  %744 = vmatpush2.msra.mxu0 0.0
  %745 = vmatprep.mubr.f32.mxu0 0.0
  %v746 = vand.u32 %v25, 4294901760
  %747 = vmatmul.mubr.f32.gmra.mxu0 %v746
  %v748 = vpop.f32.mrf.mxu0
  %v749 = vadd.f32 %v646, %v748
  %v750 = vpop.f32.mrf.mxu0
  %v751 = vadd.f32 %v648, %v750
  %752 = vmatprep.mubr.f32.mxu0 0.0
  %v753 = vand.u32 %v28, 4294901760
  %754 = vmatmul.mubr.f32.gmra.mxu0 %v753
  %v755 = vpop.f32.mrf.mxu0
  %v756 = vadd.f32 %v657, %v755
  %v757 = vpop.f32.mrf.mxu0
  %v758 = vadd.f32 %v659, %v757
  %759 = vdwg.mxu0
  %760 = vmatprep.subr.mxu0 0.0
  %761 = vmatpush1.msra.mxu0 0.0
  %762 = vmatprep.subr.mxu0 0.0
  %763 = vmatpush1.msra.mxu0 0.0
  %764 = vmatprep.subr.mxu0 0.0
  %765 = vmatpush1.msra.mxu0 0.0
  %766 = vmatprep.subr.mxu0 0.0
  %767 = vmatpush1.msra.mxu0 0.0
  %768 = vmatprep.subr.mxu0 0.0
  %769 = vmatpush1.msra.mxu0 0.0
  %770 = vmatprep.subr.mxu0 0.0
  %771 = vmatpush1.msra.mxu0 0.0
  %772 = vmatprep.subr.mxu0 0.0
  %773 = vmatpush1.msra.mxu0 0.0
  %774 = vmatprep.subr.mxu0 0.0
  %775 = vmatpush1.msra.mxu0 0.0
  %776 = vmatprep.subr.mxu0 0.0
  %777 = vmatpush1.msra.mxu0 0.0
  %778 = vmatprep.subr.mxu0 0.0
  %779 = vmatpush1.msra.mxu0 0.0
  %780 = vmatprep.subr.mxu0 0.0
  %781 = vmatpush1.msra.mxu0 0.0
  %782 = vmatprep.subr.mxu0 0.0
  %783 = vmatpush1.msra.mxu0 0.0
  %784 = vmatprep.subr.mxu0 0.0
  %785 = vmatpush1.msra.mxu0 0.0
  %786 = vmatprep.subr.mxu0 0.0
  %787 = vmatpush1.msra.mxu0 0.0
  %v788 = vand.u32 %v21, 4294901760
  %v789 = vsub.f32 %v21, %v788
  %790 = vmatprep.subr.mxu0 %v789
  %v791 = vand.u32 %v20, 4294901760
  %v792 = vsub.f32 %v20, %v791
  %793 = vmatpush1.msra.mxu0 %v792
  %v794 = vand.u32 %v16, 4294901760
  %v795 = vsub.f32 %v16, %v794
  %796 = vmatprep.subr.mxu0 %v795
  %v797 = vand.u32 %v15, 4294901760
  %v798 = vsub.f32 %v15, %v797
  %799 = vmatpush1.msra.mxu0 %v798
  %800 = vmatprep.subr.mxu0 0.0
  %801 = vmatpush2.msra.mxu0 0.0
  %802 = vmatprep.subr.mxu0 0.0
  %803 = vmatpush2.msra.mxu0 0.0
  %804 = vmatprep.subr.mxu0 0.0
  %805 = vmatpush2.msra.mxu0 0.0
  %806 = vmatprep.subr.mxu0 0.0
  %807 = vmatpush2.msra.mxu0 0.0
  %808 = vmatprep.subr.mxu0 0.0
  %809 = vmatpush2.msra.mxu0 0.0
  %810 = vmatprep.subr.mxu0 0.0
  %811 = vmatpush2.msra.mxu0 0.0
  %812 = vmatprep.subr.mxu0 0.0
  %813 = vmatpush2.msra.mxu0 0.0
  %814 = vmatprep.subr.mxu0 0.0
  %815 = vmatpush2.msra.mxu0 0.0
  %816 = vmatprep.subr.mxu0 0.0
  %817 = vmatpush2.msra.mxu0 0.0
  %818 = vmatprep.subr.mxu0 0.0
  %819 = vmatpush2.msra.mxu0 0.0
  %820 = vmatprep.subr.mxu0 0.0
  %821 = vmatpush2.msra.mxu0 0.0
  %822 = vmatprep.subr.mxu0 0.0
  %823 = vmatpush2.msra.mxu0 0.0
  %824 = vmatprep.subr.mxu0 0.0
  %825 = vmatpush2.msra.mxu0 0.0
  %826 = vmatprep.subr.mxu0 0.0
  %827 = vmatpush2.msra.mxu0 0.0
  %828 = vmatprep.subr.mxu0 0.0
  %829 = vmatpush2.msra.mxu0 0.0
  %830 = vmatprep.subr.mxu0 0.0
  %831 = vmatpush2.msra.mxu0 0.0
  %832 = vmatprep.mubr.f32.mxu0 0.0
  %v833 = vand.u32 %v25, 4294901760
  %v834 = vsub.f32 %v25, %v833
  %835 = vmatmul.mubr.f32.gmra.mxu0 %v834
  %v836 = vpop.f32.mrf.mxu0
  %v837 = vadd.f32 %v749, %v836
  %v838 = vpop.f32.mrf.mxu0
  %v839 = vadd.f32 %v751, %v838
  %840 = vmatprep.mubr.f32.mxu0 0.0
  %v841 = vand.u32 %v28, 4294901760
  %v842 = vsub.f32 %v28, %v841
  %843 = vmatmul.mubr.f32.gmra.mxu0 %v842
  %v844 = vpop.f32.mrf.mxu0
  %v845 = vadd.f32 %v756, %v844
  %v846 = vpop.f32.mrf.mxu0
  %v847 = vadd.f32 %v758, %v846
  %848 = vdwg.mxu0
  %849 = vmatprep.subr.mxu0 0.0
  %850 = vmatpush1.msra.mxu0 0.0
  %851 = vmatprep.subr.mxu0 0.0
  %852 = vmatpush1.msra.mxu0 0.0
  %853 = vmatprep.subr.mxu0 0.0
  %854 = vmatpush1.msra.mxu0 0.0
  %855 = vmatprep.subr.mxu0 0.0
  %856 = vmatpush1.msra.mxu0 0.0
  %857 = vmatprep.subr.mxu0 0.0
  %858 = vmatpush1.msra.mxu0 0.0
  %859 = vmatprep.subr.mxu0 0.0
  %860 = vmatpush1.msra.mxu0 0.0
  %861 = vmatprep.subr.mxu0 0.0
  %862 = vmatpush1.msra.mxu0 0.0
  %863 = vmatprep.subr.mxu0 0.0
  %864 = vmatpush1.msra.mxu0 0.0
  %865 = vmatprep.subr.mxu0 0.0
  %866 = vmatpush1.msra.mxu0 0.0
  %867 = vmatprep.subr.mxu0 0.0
  %868 = vmatpush1.msra.mxu0 0.0
  %869 = vmatprep.subr.mxu0 0.0
  %870 = vmatpush1.msra.mxu0 0.0
  %871 = vmatprep.subr.mxu0 0.0
  %872 = vmatpush1.msra.mxu0 0.0
  %873 = vmatprep.subr.mxu0 0.0
  %874 = vmatpush1.msra.mxu0 0.0
  %875 = vmatprep.subr.mxu0 0.0
  %876 = vmatpush1.msra.mxu0 0.0
  %v877 = vand.u32 %v21, 4294901760
  %878 = vmatprep.subr.mxu0 %v877
  %v879 = vand.u32 %v20, 4294901760
  %880 = vmatpush1.msra.mxu0 %v879
  %v881 = vand.u32 %v16, 4294901760
  %882 = vmatprep.subr.mxu0 %v881
  %v883 = vand.u32 %v15, 4294901760
  %884 = vmatpush1.msra.mxu0 %v883
  %885 = vmatprep.subr.mxu0 0.0
  %886 = vmatpush2.msra.mxu0 0.0
  %887 = vmatprep.subr.mxu0 0.0
  %888 = vmatpush2.msra.mxu0 0.0
  %889 = vmatprep.subr.mxu0 0.0
  %890 = vmatpush2.msra.mxu0 0.0
  %891 = vmatprep.subr.mxu0 0.0
  %892 = vmatpush2.msra.mxu0 0.0
  %893 = vmatprep.subr.mxu0 0.0
  %894 = vmatpush2.msra.mxu0 0.0
  %895 = vmatprep.subr.mxu0 0.0
  %896 = vmatpush2.msra.mxu0 0.0
  %897 = vmatprep.subr.mxu0 0.0
  %898 = vmatpush2.msra.mxu0 0.0
  %899 = vmatprep.subr.mxu0 0.0
  %900 = vmatpush2.msra.mxu0 0.0
  %901 = vmatprep.subr.mxu0 0.0
  %902 = vmatpush2.msra.mxu0 0.0
  %903 = vmatprep.subr.mxu0 0.0
  %904 = vmatpush2.msra.mxu0 0.0
  %905 = vmatprep.subr.mxu0 0.0
  %906 = vmatpush2.msra.mxu0 0.0
  %907 = vmatprep.subr.mxu0 0.0
  %908 = vmatpush2.msra.mxu0 0.0
  %909 = vmatprep.subr.mxu0 0.0
  %910 = vmatpush2.msra.mxu0 0.0
  %911 = vmatprep.subr.mxu0 0.0
  %912 = vmatpush2.msra.mxu0 0.0
  %913 = vmatprep.subr.mxu0 0.0
  %914 = vmatpush2.msra.mxu0 0.0
  %915 = vmatprep.subr.mxu0 0.0
  %916 = vmatpush2.msra.mxu0 0.0
  %917 = vmatprep.mubr.f32.mxu0 0.0
  %v918 = vand.u32 %v25, 4294901760
  %v919 = vsub.f32 %v25, %v918
  %v920 = vand.u32 %v919, 4294901760
  %921 = vmatmul.mubr.f32.gmra.mxu0 %v920
  %v922 = vpop.f32.mrf.mxu0
  %v923 = vadd.f32 %v837, %v922
  %v924 = vpop.f32.mrf.mxu0
  %v925 = vadd.f32 %v839, %v924
  %926 = vmatprep.mubr.f32.mxu0 0.0
  %v927 = vand.u32 %v28, 4294901760
  %v928 = vsub.f32 %v28, %v927
  %v929 = vand.u32 %v928, 4294901760
  %930 = vmatmul.mubr.f32.gmra.mxu0 %v929
  %v931 = vpop.f32.mrf.mxu0
  %v932 = vadd.f32 %v845, %v931
  %v933 = vpop.f32.mrf.mxu0
  %v934 = vadd.f32 %v847, %v933
  %935 = vdwg.mxu0
  %936 = vmatprep.subr.mxu0 0.0
  %937 = vmatpush1.msra.mxu0 0.0
  %938 = vmatprep.subr.mxu0 0.0
  %939 = vmatpush1.msra.mxu0 0.0
  %940 = vmatprep.subr.mxu0 0.0
  %941 = vmatpush1.msra.mxu0 0.0
  %942 = vmatprep.subr.mxu0 0.0
  %943 = vmatpush1.msra.mxu0 0.0
  %944 = vmatprep.subr.mxu0 0.0
  %945 = vmatpush1.msra.mxu0 0.0
  %946 = vmatprep.subr.mxu0 0.0
  %947 = vmatpush1.msra.mxu0 0.0
  %948 = vmatprep.subr.mxu0 0.0
  %949 = vmatpush1.msra.mxu0 0.0
  %950 = vmatprep.subr.mxu0 0.0
  %951 = vmatpush1.msra.mxu0 0.0
  %952 = vmatprep.subr.mxu0 0.0
  %953 = vmatpush1.msra.mxu0 0.0
  %954 = vmatprep.subr.mxu0 0.0
  %955 = vmatpush1.msra.mxu0 0.0
  %956 = vmatprep.subr.mxu0 0.0
  %957 = vmatpush1.msra.mxu0 0.0
  %958 = vmatprep.subr.mxu0 0.0
  %959 = vmatpush1.msra.mxu0 0.0
  %960 = vmatprep.subr.mxu0 0.0
  %961 = vmatpush1.msra.mxu0 0.0
  %962 = vmatprep.subr.mxu0 0.0
  %963 = vmatpush1.msra.mxu0 0.0
  %v964 = vand.u32 %v21, 4294901760
  %v965 = vsub.f32 %v21, %v964
  %v966 = vand.u32 %v965, 4294901760
  %967 = vmatprep.subr.mxu0 %v966
  %v968 = vand.u32 %v20, 4294901760
  %v969 = vsub.f32 %v20, %v968
  %v970 = vand.u32 %v969, 4294901760
  %971 = vmatpush1.msra.mxu0 %v970
  %v972 = vand.u32 %v16, 4294901760
  %v973 = vsub.f32 %v16, %v972
  %v974 = vand.u32 %v973, 4294901760
  %975 = vmatprep.subr.mxu0 %v974
  %v976 = vand.u32 %v15, 4294901760
  %v977 = vsub.f32 %v15, %v976
  %v978 = vand.u32 %v977, 4294901760
  %979 = vmatpush1.msra.mxu0 %v978
  %980 = vmatprep.subr.mxu0 0.0
  %981 = vmatpush2.msra.mxu0 0.0
  %982 = vmatprep.subr.mxu0 0.0
  %983 = vmatpush2.msra.mxu0 0.0
  %984 = vmatprep.subr.mxu0 0.0
  %985 = vmatpush2.msra.mxu0 0.0
  %986 = vmatprep.subr.mxu0 0.0
  %987 = vmatpush2.msra.mxu0 0.0
  %988 = vmatprep.subr.mxu0 0.0
  %989 = vmatpush2.msra.mxu0 0.0
  %990 = vmatprep.subr.mxu0 0.0
  %991 = vmatpush2.msra.mxu0 0.0
  %992 = vmatprep.subr.mxu0 0.0
  %993 = vmatpush2.msra.mxu0 0.0
  %994 = vmatprep.subr.mxu0 0.0
  %995 = vmatpush2.msra.mxu0 0.0
  %996 = vmatprep.subr.mxu0 0.0
  %997 = vmatpush2.msra.mxu0 0.0
  %998 = vmatprep.subr.mxu0 0.0
  %999 = vmatpush2.msra.mxu0 0.0
  %1000 = vmatprep.subr.mxu0 0.0
  %1001 = vmatpush2.msra.mxu0 0.0
  %1002 = vmatprep.subr.mxu0 0.0
  %1003 = vmatpush2.msra.mxu0 0.0
  %1004 = vmatprep.subr.mxu0 0.0
  %1005 = vmatpush2.msra.mxu0 0.0
  %1006 = vmatprep.subr.mxu0 0.0
  %1007 = vmatpush2.msra.mxu0 0.0
  %1008 = vmatprep.subr.mxu0 0.0
  %1009 = vmatpush2.msra.mxu0 0.0
  %1010 = vmatprep.subr.mxu0 0.0
  %1011 = vmatpush2.msra.mxu0 0.0
  %1012 = vmatprep.mubr.f32.mxu0 0.0
  %v1013 = vand.u32 %v25, 4294901760
  %1014 = vmatmul.mubr.f32.gmra.mxu0 %v1013
  %v1015 = vpop.f32.mrf.mxu0
  %v1016 = vadd.f32 %v923, %v1015
  %v1017 = vpop.f32.mrf.mxu0
  %v1018 = vadd.f32 %v925, %v1017
  %1019 = vmatprep.mubr.f32.mxu0 0.0
  %v1020 = vand.u32 %v28, 4294901760
  %1021 = vmatmul.mubr.f32.gmra.mxu0 %v1020
  %v1022 = vpop.f32.mrf.mxu0
  %v1023 = vadd.f32 %v932, %v1022
  %v1024 = vpop.f32.mrf.mxu0
  %v1025 = vadd.f32 %v934, %v1024
  %1026 = vdwg.mxu0
  %1027 = vmatprep.subr.mxu0 0.0
  %1028 = vmatpush1.msra.mxu0 0.0
  %1029 = vmatprep.subr.mxu0 0.0
  %1030 = vmatpush1.msra.mxu0 0.0
  %1031 = vmatprep.subr.mxu0 0.0
  %1032 = vmatpush1.msra.mxu0 0.0
  %1033 = vmatprep.subr.mxu0 0.0
  %1034 = vmatpush1.msra.mxu0 0.0
  %1035 = vmatprep.subr.mxu0 0.0
  %1036 = vmatpush1.msra.mxu0 0.0
  %1037 = vmatprep.subr.mxu0 0.0
  %1038 = vmatpush1.msra.mxu0 0.0
  %1039 = vmatprep.subr.mxu0 0.0
  %1040 = vmatpush1.msra.mxu0 0.0
  %1041 = vmatprep.subr.mxu0 0.0
  %1042 = vmatpush1.msra.mxu0 0.0
  %1043 = vmatprep.subr.mxu0 0.0
  %1044 = vmatpush1.msra.mxu0 0.0
  %1045 = vmatprep.subr.mxu0 0.0
  %1046 = vmatpush1.msra.mxu0 0.0
  %1047 = vmatprep.subr.mxu0 0.0
  %1048 = vmatpush1.msra.mxu0 0.0
  %1049 = vmatprep.subr.mxu0 0.0
  %1050 = vmatpush1.msra.mxu0 0.0
  %1051 = vmatprep.subr.mxu0 0.0
  %1052 = vmatpush1.msra.mxu0 0.0
  %1053 = vmatprep.subr.mxu0 0.0
  %1054 = vmatpush1.msra.mxu0 0.0
  %v1055 = vand.u32 %v21, 4294901760
  %1056 = vmatprep.subr.mxu0 %v1055
  %v1057 = vand.u32 %v20, 4294901760
  %1058 = vmatpush1.msra.mxu0 %v1057
  %v1059 = vand.u32 %v16, 4294901760
  %1060 = vmatprep.subr.mxu0 %v1059
  %v1061 = vand.u32 %v15, 4294901760
  %1062 = vmatpush1.msra.mxu0 %v1061
  %1063 = vmatprep.subr.mxu0 0.0
  %1064 = vmatpush2.msra.mxu0 0.0
  %1065 = vmatprep.subr.mxu0 0.0
  %1066 = vmatpush2.msra.mxu0 0.0
  %1067 = vmatprep.subr.mxu0 0.0
  %1068 = vmatpush2.msra.mxu0 0.0
  %1069 = vmatprep.subr.mxu0 0.0
  %1070 = vmatpush2.msra.mxu0 0.0
  %1071 = vmatprep.subr.mxu0 0.0
  %1072 = vmatpush2.msra.mxu0 0.0
  %1073 = vmatprep.subr.mxu0 0.0
  %1074 = vmatpush2.msra.mxu0 0.0
  %1075 = vmatprep.subr.mxu0 0.0
  %1076 = vmatpush2.msra.mxu0 0.0
  %1077 = vmatprep.subr.mxu0 0.0
  %1078 = vmatpush2.msra.mxu0 0.0
  %1079 = vmatprep.subr.mxu0 0.0
  %1080 = vmatpush2.msra.mxu0 0.0
  %1081 = vmatprep.subr.mxu0 0.0
  %1082 = vmatpush2.msra.mxu0 0.0
  %1083 = vmatprep.subr.mxu0 0.0
  %1084 = vmatpush2.msra.mxu0 0.0
  %1085 = vmatprep.subr.mxu0 0.0
  %1086 = vmatpush2.msra.mxu0 0.0
  %1087 = vmatprep.subr.mxu0 0.0
  %1088 = vmatpush2.msra.mxu0 0.0
  %1089 = vmatprep.subr.mxu0 0.0
  %1090 = vmatpush2.msra.mxu0 0.0
  %1091 = vmatprep.subr.mxu0 0.0
  %1092 = vmatpush2.msra.mxu0 0.0
  %1093 = vmatprep.subr.mxu0 0.0
  %1094 = vmatpush2.msra.mxu0 0.0
  %1095 = vmatprep.mubr.f32.mxu0 0.0
  %v1096 = vand.u32 %v25, 4294901760
  %1097 = vmatmul.mubr.f32.gmra.mxu0 %v1096
  %v1098 = vpop.f32.mrf.mxu0
  %v1099 = vadd.f32 %v1016, %v1098
  %v1100 = vpop.f32.mrf.mxu0
  %v1101 = vadd.f32 %v1018, %v1100
  %1102 = vmatprep.mubr.f32.mxu0 0.0
  %v1103 = vand.u32 %v28, 4294901760
  %1104 = vmatmul.mubr.f32.gmra.mxu0 %v1103
  %v1105 = vpop.f32.mrf.mxu0
  %v1106 = vadd.f32 %v1023, %v1105
  %v1107 = vpop.f32.mrf.mxu0
  %v1108 = vadd.f32 %v1025, %v1107
  %1109 = vdwg.mxu0
  %1110 = vmatprep.subr.mxu0 0.0
  %1111 = vmatpush1.msra.mxu0 0.0
  %1112 = vmatprep.subr.mxu0 0.0
  %1113 = vmatpush1.msra.mxu0 0.0
  %1114 = vmatprep.subr.mxu0 0.0
  %1115 = vmatpush1.msra.mxu0 0.0
  %1116 = vmatprep.subr.mxu0 0.0
  %1117 = vmatpush1.msra.mxu0 0.0
  %1118 = vmatprep.subr.mxu0 0.0
  %1119 = vmatpush1.msra.mxu0 0.0
  %1120 = vmatprep.subr.mxu0 0.0
  %1121 = vmatpush1.msra.mxu0 0.0
  %1122 = vmatprep.subr.mxu0 0.0
  %1123 = vmatpush1.msra.mxu0 0.0
  %1124 = vmatprep.subr.mxu0 0.0
  %1125 = vmatpush1.msra.mxu0 0.0
  %1126 = vmatprep.subr.mxu0 0.0
  %1127 = vmatpush1.msra.mxu0 0.0
  %1128 = vmatprep.subr.mxu0 0.0
  %1129 = vmatpush1.msra.mxu0 0.0
  %1130 = vmatprep.subr.mxu0 0.0
  %1131 = vmatpush1.msra.mxu0 0.0
  %1132 = vmatprep.subr.mxu0 0.0
  %1133 = vmatpush1.msra.mxu0 0.0
  %1134 = vmatprep.subr.mxu0 0.0
  %1135 = vmatpush1.msra.mxu0 0.0
  %1136 = vmatprep.subr.mxu0 0.0
  %1137 = vmatpush1.msra.mxu0 0.0
  %1138 = vmatprep.subr.mxu0 0.0
  %v1139 = vand.u32 %v22, 4294901760
  %1140 = vmatpush1.msra.mxu0 %v1139
  %1141 = vmatprep.subr.mxu0 0.0
  %v1142 = vand.u32 %v17, 4294901760
  %1143 = vmatpush1.msra.mxu0 %v1142
  %1144 = vmatprep.subr.mxu0 0.0
  %1145 = vmatpush2.msra.mxu0 0.0
  %1146 = vmatprep.subr.mxu0 0.0
  %1147 = vmatpush2.msra.mxu0 0.0
  %1148 = vmatprep.subr.mxu0 0.0
  %1149 = vmatpush2.msra.mxu0 0.0
  %1150 = vmatprep.subr.mxu0 0.0
  %1151 = vmatpush2.msra.mxu0 0.0
  %1152 = vmatprep.subr.mxu0 0.0
  %1153 = vmatpush2.msra.mxu0 0.0
  %1154 = vmatprep.subr.mxu0 0.0
  %1155 = vmatpush2.msra.mxu0 0.0
  %1156 = vmatprep.subr.mxu0 0.0
  %1157 = vmatpush2.msra.mxu0 0.0
  %1158 = vmatprep.subr.mxu0 0.0
  %1159 = vmatpush2.msra.mxu0 0.0
  %1160 = vmatprep.subr.mxu0 0.0
  %1161 = vmatpush2.msra.mxu0 0.0
  %1162 = vmatprep.subr.mxu0 0.0
  %1163 = vmatpush2.msra.mxu0 0.0
  %1164 = vmatprep.subr.mxu0 0.0
  %1165 = vmatpush2.msra.mxu0 0.0
  %1166 = vmatprep.subr.mxu0 0.0
  %1167 = vmatpush2.msra.mxu0 0.0
  %1168 = vmatprep.subr.mxu0 0.0
  %1169 = vmatpush2.msra.mxu0 0.0
  %1170 = vmatprep.subr.mxu0 0.0
  %1171 = vmatpush2.msra.mxu0 0.0
  %1172 = vmatprep.subr.mxu0 0.0
  %1173 = vmatpush2.msra.mxu0 0.0
  %1174 = vmatprep.subr.mxu0 0.0
  %1175 = vmatpush2.msra.mxu0 0.0
  %1176 = vmatprep.mubr.f32.mxu0 0.0
  %v1177 = vand.u32 %v25, 4294901760
  %v1178 = vsub.f32 %v25, %v1177
  %v1179 = vand.u32 %v1178, 4294901760
  %v1180 = vsub.f32 %v1178, %v1179
  %v1181 = vand.u32 %v1180, 4294901760
  %1182 = vmatmul.mubr.f32.gmra.mxu0 %v1181
  %v1183 = vpop.f32.mrf.mxu0
  %v1184 = vadd.f32 0.0, %v1183
  %v1185 = vpop.f32.mrf.mxu0
  %1186 = vmatprep.mubr.f32.mxu0 0.0
  %v1187 = vand.u32 %v28, 4294901760
  %v1188 = vsub.f32 %v28, %v1187
  %v1189 = vand.u32 %v1188, 4294901760
  %v1190 = vsub.f32 %v1188, %v1189
  %v1191 = vand.u32 %v1190, 4294901760
  %1192 = vmatmul.mubr.f32.gmra.mxu0 %v1191
  %v1193 = vpop.f32.mrf.mxu0
  %v1194 = vadd.f32 0.0, %v1193
  %v1195 = vpop.f32.mrf.mxu0
  %1196 = vdwg.mxu0
  %1197 = vmatprep.subr.mxu0 0.0
  %1198 = vmatpush1.msra.mxu0 0.0
  %1199 = vmatprep.subr.mxu0 0.0
  %1200 = vmatpush1.msra.mxu0 0.0
  %1201 = vmatprep.subr.mxu0 0.0
  %1202 = vmatpush1.msra.mxu0 0.0
  %1203 = vmatprep.subr.mxu0 0.0
  %1204 = vmatpush1.msra.mxu0 0.0
  %1205 = vmatprep.subr.mxu0 0.0
  %1206 = vmatpush1.msra.mxu0 0.0
  %1207 = vmatprep.subr.mxu0 0.0
  %1208 = vmatpush1.msra.mxu0 0.0
  %1209 = vmatprep.subr.mxu0 0.0
  %1210 = vmatpush1.msra.mxu0 0.0
  %1211 = vmatprep.subr.mxu0 0.0
  %1212 = vmatpush1.msra.mxu0 0.0
  %1213 = vmatprep.subr.mxu0 0.0
  %1214 = vmatpush1.msra.mxu0 0.0
  %1215 = vmatprep.subr.mxu0 0.0
  %1216 = vmatpush1.msra.mxu0 0.0
  %1217 = vmatprep.subr.mxu0 0.0
  %1218 = vmatpush1.msra.mxu0 0.0
  %1219 = vmatprep.subr.mxu0 0.0
  %1220 = vmatpush1.msra.mxu0 0.0
  %1221 = vmatprep.subr.mxu0 0.0
  %1222 = vmatpush1.msra.mxu0 0.0
  %1223 = vmatprep.subr.mxu0 0.0
  %1224 = vmatpush1.msra.mxu0 0.0
  %1225 = vmatprep.subr.mxu0 0.0
  %v1226 = vand.u32 %v22, 4294901760
  %v1227 = vsub.f32 %v22, %v1226
  %v1228 = vand.u32 %v1227, 4294901760
  %v1229 = vsub.f32 %v1227, %v1228
  %v1230 = vand.u32 %v1229, 4294901760
  %1231 = vmatpush1.msra.mxu0 %v1230
  %1232 = vmatprep.subr.mxu0 0.0
  %v1233 = vand.u32 %v17, 4294901760
  %v1234 = vsub.f32 %v17, %v1233
  %v1235 = vand.u32 %v1234, 4294901760
  %v1236 = vsub.f32 %v1234, %v1235
  %v1237 = vand.u32 %v1236, 4294901760
  %1238 = vmatpush1.msra.mxu0 %v1237
  %1239 = vmatprep.subr.mxu0 0.0
  %1240 = vmatpush2.msra.mxu0 0.0
  %1241 = vmatprep.subr.mxu0 0.0
  %1242 = vmatpush2.msra.mxu0 0.0
  %1243 = vmatprep.subr.mxu0 0.0
  %1244 = vmatpush2.msra.mxu0 0.0
  %1245 = vmatprep.subr.mxu0 0.0
  %1246 = vmatpush2.msra.mxu0 0.0
  %1247 = vmatprep.subr.mxu0 0.0
  %1248 = vmatpush2.msra.mxu0 0.0
  %1249 = vmatprep.subr.mxu0 0.0
  %1250 = vmatpush2.msra.mxu0 0.0
  %1251 = vmatprep.subr.mxu0 0.0
  %1252 = vmatpush2.msra.mxu0 0.0
  %1253 = vmatprep.subr.mxu0 0.0
  %1254 = vmatpush2.msra.mxu0 0.0
  %1255 = vmatprep.subr.mxu0 0.0
  %1256 = vmatpush2.msra.mxu0 0.0
  %1257 = vmatprep.subr.mxu0 0.0
  %1258 = vmatpush2.msra.mxu0 0.0
  %1259 = vmatprep.subr.mxu0 0.0
  %1260 = vmatpush2.msra.mxu0 0.0
  %1261 = vmatprep.subr.mxu0 0.0
  %1262 = vmatpush2.msra.mxu0 0.0
  %1263 = vmatprep.subr.mxu0 0.0
  %1264 = vmatpush2.msra.mxu0 0.0
  %1265 = vmatprep.subr.mxu0 0.0
  %1266 = vmatpush2.msra.mxu0 0.0
  %1267 = vmatprep.subr.mxu0 0.0
  %1268 = vmatpush2.msra.mxu0 0.0
  %1269 = vmatprep.subr.mxu0 0.0
  %1270 = vmatpush2.msra.mxu0 0.0
  %1271 = vmatprep.mubr.f32.mxu0 0.0
  %v1272 = vand.u32 %v25, 4294901760
  %1273 = vmatmul.mubr.f32.gmra.mxu0 %v1272
  %v1274 = vpop.f32.mrf.mxu0
  %v1275 = vadd.f32 %v1184, %v1274
  %v1276 = vpop.f32.mrf.mxu0
  %1277 = vmatprep.mubr.f32.mxu0 0.0
  %v1278 = vand.u32 %v28, 4294901760
  %1279 = vmatmul.mubr.f32.gmra.mxu0 %v1278
  %v1280 = vpop.f32.mrf.mxu0
  %v1281 = vadd.f32 %v1194, %v1280
  %v1282 = vpop.f32.mrf.mxu0
  %1283 = vdwg.mxu0
  %1284 = vmatprep.subr.mxu0 0.0
  %1285 = vmatpush1.msra.mxu0 0.0
  %1286 = vmatprep.subr.mxu0 0.0
  %1287 = vmatpush1.msra.mxu0 0.0
  %1288 = vmatprep.subr.mxu0 0.0
  %1289 = vmatpush1.msra.mxu0 0.0
  %1290 = vmatprep.subr.mxu0 0.0
  %1291 = vmatpush1.msra.mxu0 0.0
  %1292 = vmatprep.subr.mxu0 0.0
  %1293 = vmatpush1.msra.mxu0 0.0
  %1294 = vmatprep.subr.mxu0 0.0
  %1295 = vmatpush1.msra.mxu0 0.0
  %1296 = vmatprep.subr.mxu0 0.0
  %1297 = vmatpush1.msra.mxu0 0.0
  %1298 = vmatprep.subr.mxu0 0.0
  %1299 = vmatpush1.msra.mxu0 0.0
  %1300 = vmatprep.subr.mxu0 0.0
  %1301 = vmatpush1.msra.mxu0 0.0
  %1302 = vmatprep.subr.mxu0 0.0
  %1303 = vmatpush1.msra.mxu0 0.0
  %1304 = vmatprep.subr.mxu0 0.0
  %1305 = vmatpush1.msra.mxu0 0.0
  %1306 = vmatprep.subr.mxu0 0.0
  %1307 = vmatpush1.msra.mxu0 0.0
  %1308 = vmatprep.subr.mxu0 0.0
  %1309 = vmatpush1.msra.mxu0 0.0
  %1310 = vmatprep.subr.mxu0 0.0
  %1311 = vmatpush1.msra.mxu0 0.0
  %1312 = vmatprep.subr.mxu0 0.0
  %v1313 = vand.u32 %v22, 4294901760
  %v1314 = vsub.f32 %v22, %v1313
  %1315 = vmatpush1.msra.mxu0 %v1314
  %1316 = vmatprep.subr.mxu0 0.0
  %v1317 = vand.u32 %v17, 4294901760
  %v1318 = vsub.f32 %v17, %v1317
  %1319 = vmatpush1.msra.mxu0 %v1318
  %1320 = vmatprep.subr.mxu0 0.0
  %1321 = vmatpush2.msra.mxu0 0.0
  %1322 = vmatprep.subr.mxu0 0.0
  %1323 = vmatpush2.msra.mxu0 0.0
  %1324 = vmatprep.subr.mxu0 0.0
  %1325 = vmatpush2.msra.mxu0 0.0
  %1326 = vmatprep.subr.mxu0 0.0
  %1327 = vmatpush2.msra.mxu0 0.0
  %1328 = vmatprep.subr.mxu0 0.0
  %1329 = vmatpush2.msra.mxu0 0.0
  %1330 = vmatprep.subr.mxu0 0.0
  %1331 = vmatpush2.msra.mxu0 0.0
  %1332 = vmatprep.subr.mxu0 0.0
  %1333 = vmatpush2.msra.mxu0 0.0
  %1334 = vmatprep.subr.mxu0 0.0
  %1335 = vmatpush2.msra.mxu0 0.0
  %1336 = vmatprep.subr.mxu0 0.0
  %1337 = vmatpush2.msra.mxu0 0.0
  %1338 = vmatprep.subr.mxu0 0.0
  %1339 = vmatpush2.msra.mxu0 0.0
  %1340 = vmatprep.subr.mxu0 0.0
  %1341 = vmatpush2.msra.mxu0 0.0
  %1342 = vmatprep.subr.mxu0 0.0
  %1343 = vmatpush2.msra.mxu0 0.0
  %1344 = vmatprep.subr.mxu0 0.0
  %1345 = vmatpush2.msra.mxu0 0.0
  %1346 = vmatprep.subr.mxu0 0.0
  %1347 = vmatpush2.msra.mxu0 0.0
  %1348 = vmatprep.subr.mxu0 0.0
  %1349 = vmatpush2.msra.mxu0 0.0
  %1350 = vmatprep.subr.mxu0 0.0
  %1351 = vmatpush2.msra.mxu0 0.0
  %1352 = vmatprep.mubr.f32.mxu0 0.0
  %v1353 = vand.u32 %v25, 4294901760
  %v1354 = vsub.f32 %v25, %v1353
  %1355 = vmatmul.mubr.f32.gmra.mxu0 %v1354
  %v1356 = vpop.f32.mrf.mxu0
  %v1357 = vadd.f32 %v1275, %v1356
  %v1358 = vpop.f32.mrf.mxu0
  %1359 = vmatprep.mubr.f32.mxu0 0.0
  %v1360 = vand.u32 %v28, 4294901760
  %v1361 = vsub.f32 %v28, %v1360
  %1362 = vmatmul.mubr.f32.gmra.mxu0 %v1361
  %v1363 = vpop.f32.mrf.mxu0
  %v1364 = vadd.f32 %v1281, %v1363
  %v1365 = vpop.f32.mrf.mxu0
  %1366 = vdwg.mxu0
  %1367 = vmatprep.subr.mxu0 0.0
  %1368 = vmatpush1.msra.mxu0 0.0
  %1369 = vmatprep.subr.mxu0 0.0
  %1370 = vmatpush1.msra.mxu0 0.0
  %1371 = vmatprep.subr.mxu0 0.0
  %1372 = vmatpush1.msra.mxu0 0.0
  %1373 = vmatprep.subr.mxu0 0.0
  %1374 = vmatpush1.msra.mxu0 0.0
  %1375 = vmatprep.subr.mxu0 0.0
  %1376 = vmatpush1.msra.mxu0 0.0
  %1377 = vmatprep.subr.mxu0 0.0
  %1378 = vmatpush1.msra.mxu0 0.0
  %1379 = vmatprep.subr.mxu0 0.0
  %1380 = vmatpush1.msra.mxu0 0.0
  %1381 = vmatprep.subr.mxu0 0.0
  %1382 = vmatpush1.msra.mxu0 0.0
  %1383 = vmatprep.subr.mxu0 0.0
  %1384 = vmatpush1.msra.mxu0 0.0
  %1385 = vmatprep.subr.mxu0 0.0
  %1386 = vmatpush1.msra.mxu0 0.0
  %1387 = vmatprep.subr.mxu0 0.0
  %1388 = vmatpush1.msra.mxu0 0.0
  %1389 = vmatprep.subr.mxu0 0.0
  %1390 = vmatpush1.msra.mxu0 0.0
  %1391 = vmatprep.subr.mxu0 0.0
  %1392 = vmatpush1.msra.mxu0 0.0
  %1393 = vmatprep.subr.mxu0 0.0
  %1394 = vmatpush1.msra.mxu0 0.0
  %1395 = vmatprep.subr.mxu0 0.0
  %v1396 = vand.u32 %v22, 4294901760
  %1397 = vmatpush1.msra.mxu0 %v1396
  %1398 = vmatprep.subr.mxu0 0.0
  %v1399 = vand.u32 %v17, 4294901760
  %1400 = vmatpush1.msra.mxu0 %v1399
  %1401 = vmatprep.subr.mxu0 0.0
  %1402 = vmatpush2.msra.mxu0 0.0
  %1403 = vmatprep.subr.mxu0 0.0
  %1404 = vmatpush2.msra.mxu0 0.0
  %1405 = vmatprep.subr.mxu0 0.0
  %1406 = vmatpush2.msra.mxu0 0.0
  %1407 = vmatprep.subr.mxu0 0.0
  %1408 = vmatpush2.msra.mxu0 0.0
  %1409 = vmatprep.subr.mxu0 0.0
  %1410 = vmatpush2.msra.mxu0 0.0
  %1411 = vmatprep.subr.mxu0 0.0
  %1412 = vmatpush2.msra.mxu0 0.0
  %1413 = vmatprep.subr.mxu0 0.0
  %1414 = vmatpush2.msra.mxu0 0.0
  %1415 = vmatprep.subr.mxu0 0.0
  %1416 = vmatpush2.msra.mxu0 0.0
  %1417 = vmatprep.subr.mxu0 0.0
  %1418 = vmatpush2.msra.mxu0 0.0
  %1419 = vmatprep.subr.mxu0 0.0
  %1420 = vmatpush2.msra.mxu0 0.0
  %1421 = vmatprep.subr.mxu0 0.0
  %1422 = vmatpush2.msra.mxu0 0.0
  %1423 = vmatprep.subr.mxu0 0.0
  %1424 = vmatpush2.msra.mxu0 0.0
  %1425 = vmatprep.subr.mxu0 0.0
  %1426 = vmatpush2.msra.mxu0 0.0
  %1427 = vmatprep.subr.mxu0 0.0
  %1428 = vmatpush2.msra.mxu0 0.0
  %1429 = vmatprep.subr.mxu0 0.0
  %1430 = vmatpush2.msra.mxu0 0.0
  %1431 = vmatprep.subr.mxu0 0.0
  %1432 = vmatpush2.msra.mxu0 0.0
  %1433 = vmatprep.mubr.f32.mxu0 0.0
  %v1434 = vand.u32 %v25, 4294901760
  %v1435 = vsub.f32 %v25, %v1434
  %v1436 = vand.u32 %v1435, 4294901760
  %1437 = vmatmul.mubr.f32.gmra.mxu0 %v1436
  %v1438 = vpop.f32.mrf.mxu0
  %v1439 = vadd.f32 %v1357, %v1438
  %v1440 = vpop.f32.mrf.mxu0
  %1441 = vmatprep.mubr.f32.mxu0 0.0
  %v1442 = vand.u32 %v28, 4294901760
  %v1443 = vsub.f32 %v28, %v1442
  %v1444 = vand.u32 %v1443, 4294901760
  %1445 = vmatmul.mubr.f32.gmra.mxu0 %v1444
  %v1446 = vpop.f32.mrf.mxu0
  %v1447 = vadd.f32 %v1364, %v1446
  %v1448 = vpop.f32.mrf.mxu0
  %1449 = vdwg.mxu0
  %1450 = vmatprep.subr.mxu0 0.0
  %1451 = vmatpush1.msra.mxu0 0.0
  %1452 = vmatprep.subr.mxu0 0.0
  %1453 = vmatpush1.msra.mxu0 0.0
  %1454 = vmatprep.subr.mxu0 0.0
  %1455 = vmatpush1.msra.mxu0 0.0
  %1456 = vmatprep.subr.mxu0 0.0
  %1457 = vmatpush1.msra.mxu0 0.0
  %1458 = vmatprep.subr.mxu0 0.0
  %1459 = vmatpush1.msra.mxu0 0.0
  %1460 = vmatprep.subr.mxu0 0.0
  %1461 = vmatpush1.msra.mxu0 0.0
  %1462 = vmatprep.subr.mxu0 0.0
  %1463 = vmatpush1.msra.mxu0 0.0
  %1464 = vmatprep.subr.mxu0 0.0
  %1465 = vmatpush1.msra.mxu0 0.0
  %1466 = vmatprep.subr.mxu0 0.0
  %1467 = vmatpush1.msra.mxu0 0.0
  %1468 = vmatprep.subr.mxu0 0.0
  %1469 = vmatpush1.msra.mxu0 0.0
  %1470 = vmatprep.subr.mxu0 0.0
  %1471 = vmatpush1.msra.mxu0 0.0
  %1472 = vmatprep.subr.mxu0 0.0
  %1473 = vmatpush1.msra.mxu0 0.0
  %1474 = vmatprep.subr.mxu0 0.0
  %1475 = vmatpush1.msra.mxu0 0.0
  %1476 = vmatprep.subr.mxu0 0.0
  %1477 = vmatpush1.msra.mxu0 0.0
  %1478 = vmatprep.subr.mxu0 0.0
  %v1479 = vand.u32 %v22, 4294901760
  %v1480 = vsub.f32 %v22, %v1479
  %v1481 = vand.u32 %v1480, 4294901760
  %1482 = vmatpush1.msra.mxu0 %v1481
  %1483 = vmatprep.subr.mxu0 0.0
  %v1484 = vand.u32 %v17, 4294901760
  %v1485 = vsub.f32 %v17, %v1484
  %v1486 = vand.u32 %v1485, 4294901760
  %1487 = vmatpush1.msra.mxu0 %v1486
  %1488 = vmatprep.subr.mxu0 0.0
  %1489 = vmatpush2.msra.mxu0 0.0
  %1490 = vmatprep.subr.mxu0 0.0
  %1491 = vmatpush2.msra.mxu0 0.0
  %1492 = vmatprep.subr.mxu0 0.0
  %1493 = vmatpush2.msra.mxu0 0.0
  %1494 = vmatprep.subr.mxu0 0.0
  %1495 = vmatpush2.msra.mxu0 0.0
  %1496 = vmatprep.subr.mxu0 0.0
  %1497 = vmatpush2.msra.mxu0 0.0
  %1498 = vmatprep.subr.mxu0 0.0
  %1499 = vmatpush2.msra.mxu0 0.0
  %1500 = vmatprep.subr.mxu0 0.0
  %1501 = vmatpush2.msra.mxu0 0.0
  %1502 = vmatprep.subr.mxu0 0.0
  %1503 = vmatpush2.msra.mxu0 0.0
  %1504 = vmatprep.subr.mxu0 0.0
  %1505 = vmatpush2.msra.mxu0 0.0
  %1506 = vmatprep.subr.mxu0 0.0
  %1507 = vmatpush2.msra.mxu0 0.0
  %1508 = vmatprep.subr.mxu0 0.0
  %1509 = vmatpush2.msra.mxu0 0.0
  %1510 = vmatprep.subr.mxu0 0.0
  %1511 = vmatpush2.msra.mxu0 0.0
  %1512 = vmatprep.subr.mxu0 0.0
  %1513 = vmatpush2.msra.mxu0 0.0
  %1514 = vmatprep.subr.mxu0 0.0
  %1515 = vmatpush2.msra.mxu0 0.0
  %1516 = vmatprep.subr.mxu0 0.0
  %1517 = vmatpush2.msra.mxu0 0.0
  %1518 = vmatprep.subr.mxu0 0.0
  %1519 = vmatpush2.msra.mxu0 0.0
  %1520 = vmatprep.mubr.f32.mxu0 0.0
  %v1521 = vand.u32 %v25, 4294901760
  %1522 = vmatmul.mubr.f32.gmra.mxu0 %v1521
  %v1523 = vpop.f32.mrf.mxu0
  %v1524 = vadd.f32 %v1439, %v1523
  %v1525 = vpop.f32.mrf.mxu0
  %1526 = vmatprep.mubr.f32.mxu0 0.0
  %v1527 = vand.u32 %v28, 4294901760
  %1528 = vmatmul.mubr.f32.gmra.mxu0 %v1527
  %v1529 = vpop.f32.mrf.mxu0
  %v1530 = vadd.f32 %v1447, %v1529
  %v1531 = vpop.f32.mrf.mxu0
  %1532 = vdwg.mxu0
  %1533 = vmatprep.subr.mxu0 0.0
  %1534 = vmatpush1.msra.mxu0 0.0
  %1535 = vmatprep.subr.mxu0 0.0
  %1536 = vmatpush1.msra.mxu0 0.0
  %1537 = vmatprep.subr.mxu0 0.0
  %1538 = vmatpush1.msra.mxu0 0.0
  %1539 = vmatprep.subr.mxu0 0.0
  %1540 = vmatpush1.msra.mxu0 0.0
  %1541 = vmatprep.subr.mxu0 0.0
  %1542 = vmatpush1.msra.mxu0 0.0
  %1543 = vmatprep.subr.mxu0 0.0
  %1544 = vmatpush1.msra.mxu0 0.0
  %1545 = vmatprep.subr.mxu0 0.0
  %1546 = vmatpush1.msra.mxu0 0.0
  %1547 = vmatprep.subr.mxu0 0.0
  %1548 = vmatpush1.msra.mxu0 0.0
  %1549 = vmatprep.subr.mxu0 0.0
  %1550 = vmatpush1.msra.mxu0 0.0
  %1551 = vmatprep.subr.mxu0 0.0
  %1552 = vmatpush1.msra.mxu0 0.0
  %1553 = vmatprep.subr.mxu0 0.0
  %1554 = vmatpush1.msra.mxu0 0.0
  %1555 = vmatprep.subr.mxu0 0.0
  %1556 = vmatpush1.msra.mxu0 0.0
  %1557 = vmatprep.subr.mxu0 0.0
  %1558 = vmatpush1.msra.mxu0 0.0
  %1559 = vmatprep.subr.mxu0 0.0
  %1560 = vmatpush1.msra.mxu0 0.0
  %1561 = vmatprep.subr.mxu0 0.0
  %v1562 = vand.u32 %v22, 4294901760
  %1563 = vmatpush1.msra.mxu0 %v1562
  %1564 = vmatprep.subr.mxu0 0.0
  %v1565 = vand.u32 %v17, 4294901760
  %1566 = vmatpush1.msra.mxu0 %v1565
  %1567 = vmatprep.subr.mxu0 0.0
  %1568 = vmatpush2.msra.mxu0 0.0
  %1569 = vmatprep.subr.mxu0 0.0
  %1570 = vmatpush2.msra.mxu0 0.0
  %1571 = vmatprep.subr.mxu0 0.0
  %1572 = vmatpush2.msra.mxu0 0.0
  %1573 = vmatprep.subr.mxu0 0.0
  %1574 = vmatpush2.msra.mxu0 0.0
  %1575 = vmatprep.subr.mxu0 0.0
  %1576 = vmatpush2.msra.mxu0 0.0
  %1577 = vmatprep.subr.mxu0 0.0
  %1578 = vmatpush2.msra.mxu0 0.0
  %1579 = vmatprep.subr.mxu0 0.0
  %1580 = vmatpush2.msra.mxu0 0.0
  %1581 = vmatprep.subr.mxu0 0.0
  %1582 = vmatpush2.msra.mxu0 0.0
  %1583 = vmatprep.subr.mxu0 0.0
  %1584 = vmatpush2.msra.mxu0 0.0
  %1585 = vmatprep.subr.mxu0 0.0
  %1586 = vmatpush2.msra.mxu0 0.0
  %1587 = vmatprep.subr.mxu0 0.0
  %1588 = vmatpush2.msra.mxu0 0.0
  %1589 = vmatprep.subr.mxu0 0.0
  %1590 = vmatpush2.msra.mxu0 0.0
  %1591 = vmatprep.subr.mxu0 0.0
  %1592 = vmatpush2.msra.mxu0 0.0
  %1593 = vmatprep.subr.mxu0 0.0
  %1594 = vmatpush2.msra.mxu0 0.0
  %1595 = vmatprep.subr.mxu0 0.0
  %1596 = vmatpush2.msra.mxu0 0.0
  %1597 = vmatprep.subr.mxu0 0.0
  %1598 = vmatpush2.msra.mxu0 0.0
  %1599 = vmatprep.mubr.f32.mxu0 0.0
  %v1600 = vand.u32 %v25, 4294901760
  %1601 = vmatmul.mubr.f32.gmra.mxu0 %v1600
  %v1602 = vpop.f32.mrf.mxu0
  %v1603 = vadd.f32 %v1524, %v1602
  %v1604 = vpop.f32.mrf.mxu0
  %1605 = vmatprep.mubr.f32.mxu0 0.0
  %v1606 = vand.u32 %v28, 4294901760
  %1607 = vmatmul.mubr.f32.gmra.mxu0 %v1606
  %v1608 = vpop.f32.mrf.mxu0
  %v1609 = vadd.f32 %v1530, %v1608
  %v1610 = vpop.f32.mrf.mxu0
  %1611 = vdwg.mxu0
  %1612 = vst [vmem:[%s2] sm:$0xff] %v559
  %1613 = vst [vmem:[%s2 + $0x8] sm:$0xff] %v561
  %1614 = vst [vmem:[%s2 + $0x10] sm:$0xff] %v1099
  %1615 = vst [vmem:[%s2 + $0x18] sm:$0xff] %v1101
  %1616 = vst [vmem:[%s2 + $0x20] sm:$0xff] %v1603
  %1617 = vst [vmem:[%s2 + $0x28] sm:$0xff] %v566
  %1618 = vst [vmem:[%s2 + $0x30] sm:$0xff] %v568
  %1619 = vst [vmem:[%s2 + $0x38] sm:$0xff] %v1106
  %1620 = vst [vmem:[%s2 + $0x40] sm:$0xff] %v1108
  %1621 = vst [vmem:[%s2 + $0x48] sm:$0xff] %v1609
  // Predicated region
  $region10: #{conv_transpose2d.1} parent=0 // pred_check
    _
  $region11: #{conv_transpose2d.1} parent=0 // pred_check_branch
    %1623 = sbr.rel (0) target = $region13
  $region12: #{conv_transpose2d.1} parent=0 // pred_region
    _
  $region13: #{conv_transpose2d.1} parent=0 // pred_fallthru
    _
  // Predicated region
  $region14: #{conv_transpose2d.1} parent=0 // pred_check
    _
  $region15: #{conv_transpose2d.1} parent=0 // pred_check_branch
    %1625 = sbr.rel (0) target = $region17
  $region16: #{conv_transpose2d.1} parent=0 // pred_region
    _
  $region17: #{conv_transpose2d.1} parent=0 // pred_fallthru
    _

</llo_original>
